<compile_context>
chip_gen: v6e
topology: v6e:2x2x1
jax: 0.10.0
libtpu: 0.0.40
codegen_flags: <defaults>
</compile_context>

<pallas_src>
import jax
import jax.numpy as jnp
from jax.experimental import pallas as pl
from jax.experimental.pallas import tpu as pltpu


# ---------------------------------------------------------------------------
# Pallas kernel
# ---------------------------------------------------------------------------
def _adaptive_adj_kernel(nv1_ref, nv2_ref, out_ref):
    # nv1_ref: (1, N, K)   nv2_ref: (1, K, N)   out_ref: (1, Tt, N, N)
    adj = jnp.dot(
        nv1_ref[0], nv2_ref[0],
        precision=jax.lax.Precision.HIGHEST,
        preferred_element_type=jnp.float32,
    )                                                   # (N, N) on the MXU
    # Broadcast across the T-chunk and store as one lane-dense full tile.
    out_ref[...] = jnp.broadcast_to(
        adj[None, None, :, :], out_ref.shape).astype(out_ref.dtype)


def _largest_divisor_leq(n, cap):
    cap = max(1, min(n, cap))
    for d in range(cap, 0, -1):
        if n % d == 0:
            return d
    return 1


def adaptive_adjacency_pallas(nodevec1, nodevec2, num_timesteps,
                              *, out_dtype=jnp.float32,
                              t_block_bytes=4 << 20):
    """bmm(nodevec1, nodevec2) repeated along a new T axis -> (B, T, N, N)."""
    B, N, K = nodevec1.shape
    assert nodevec2.shape == (B, K, N), nodevec2.shape
    T = int(num_timesteps)

    # Pick a T-chunk so each output block is <= t_block_bytes (VMEM budget),
    # while Tt divides T so every block is full.
    bytes_per_t = N * N * jnp.dtype(out_dtype).itemsize
    Tt = _largest_divisor_leq(T, max(1, t_block_bytes // max(1, bytes_per_t)))
    grid = (B, T // Tt)

    return pl.pallas_call(
        _adaptive_adj_kernel,
        out_shape=jax.ShapeDtypeStruct((B, T, N, N), out_dtype),
        grid=grid,
        in_specs=[
            pl.BlockSpec((1, N, K), lambda b, t: (b, 0, 0)),
            pl.BlockSpec((1, K, N), lambda b, t: (b, 0, 0)),
        ],
        out_specs=pl.BlockSpec((1, Tt, N, N), lambda b, t: (b, t, 0, 0)),
        compiler_params=pltpu.CompilerParams(
            dimension_semantics=("parallel", "parallel"),
            vmem_limit_bytes=32 << 20,
        ),
    )(nodevec1, nodevec2)


def adaptive_adjacency_forward(x, nodevec1, nodevec2, supports=None):
    """Matches AdaptiveAdjacencyMatrix.forward (addaptadj=True)."""
    B, T, N, _ = x.shape
    adj = adaptive_adjacency_pallas(nodevec1, nodevec2, T)
    if supports:
        # Spec concatenates the (static) supports along dim 0; plain-JAX glue.
        adj = jnp.concatenate([adj] + [jnp.asarray(s) for s in supports], axis=0)
    return adj


def init_nodevecs(key, batch_size, num_nodes, k=10):
    """Parameter init matching the aptinit=None branch (randn * 0.1)."""
    k1, k2 = jax.random.split(key)
    nv1 = jax.random.normal(k1, (batch_size, num_nodes, k), jnp.float32) * 0.1
    nv2 = jax.random.normal(k2, (batch_size, k, num_nodes), jnp.float32) * 0.1
    return nv1, nv2
    # TODO(synk): aptinit SVD-based initialization is init-time only (torch.svd)
    # and not part of the forward pass; it is not implemented here.


# ---------------------------------------------------------------------------
# Pure-JAX reference (for verification)
# ---------------------------------------------------------------------------
def _reference(x, nv1, nv2, supports=None):
    B, T, N, _ = x.shape
    adj = jnp.einsum('bnk,bkm->bnm', nv1, nv2,
                     precision=jax.lax.Precision.HIGHEST)
    adj = jnp.broadcast_to(adj[:, None, :, :], (B, T, N, N))
    if supports:
        adj = jnp.concatenate([adj] + [jnp.asarray(s) for s in supports], axis=0)
    return adj


if __name__ == "__main__":
    key = jax.random.PRNGKey(0)
    kx, kp = jax.random.split(key)

    # (batch, timesteps, nodes, features) -- nodes=128 keeps the output
    # lane-dense; the kernel also works for arbitrary N (full-extent blocks).
    B, T, N, Fdim = 2, 8, 128, 32
    x = jax.random.normal(kx, (B, T, N, Fdim), dtype=jnp.float32)
    nodevec1, nodevec2 = init_nodevecs(kp, B, N)

    out = adaptive_adjacency_forward(x, nodevec1, nodevec2)
    out = jax.block_until_ready(out)

    assert out.shape == (B, T, N, N)
    assert bool(jnp.all(jnp.isfinite(out)))
    ref = _reference(x, nodevec1, nodevec2)
    assert bool(jnp.allclose(out, ref, rtol=1e-4, atol=1e-5))

    # Also verify a small, non-lane-aligned node count (N=16).
    N2 = 16
    nv1b, nv2b = init_nodevecs(kp, B, N2)
    x2 = jnp.zeros((B, T, N2, Fdim), dtype=jnp.float32)
    out2 = jax.block_until_ready(adaptive_adjacency_forward(x2, nv1b, nv2b))
    ref2 = _reference(x2, nv1b, nv2b)
    assert out2.shape == (B, T, N2, N2)
    assert bool(jnp.allclose(out2, ref2, rtol=1e-4, atol=1e-5))

    print("KERNEL_OK")
</pallas_src>

<mosaic_0001>
module attributes {stable_mosaic.version = 11 : i64} {
  func.func @_adaptive_adj_kernel(%arg0: i32, %arg1: i32, %arg2: memref<1x128x10xf32, #tpu.memory_space<vmem>>, %arg3: memref<1x10x128xf32, #tpu.memory_space<vmem>>, %arg4: memref<1x8x128x128xf32, #tpu.memory_space<vmem>>) attributes {dimension_semantics = [#tpu.dimension_semantics<parallel>, #tpu.dimension_semantics<parallel>], iteration_bounds = array<i64: 2, 1>, scalar_prefetch = 0 : i64, scratch_operands = 0 : i64, tpu.core_type = #tpu.core_type<tc>, window_params = [{transform_indices = @transform_0, window_bounds = array<i64: 1, 128, 10>}, {transform_indices = @transform_1, window_bounds = array<i64: 1, 10, 128>}, {transform_indices = @transform_2, window_bounds = array<i64: 1, 8, 128, 128>}]} {
    %c0 = arith.constant 0 : index
    %c0_0 = arith.constant 0 : index
    %c0_1 = arith.constant 0 : index
    %0 = vector.load %arg2[%c0, %c0_0, %c0_1] : memref<1x128x10xf32, #tpu.memory_space<vmem>>, vector<1x128x10xf32>
    %1 = vector.shape_cast %0 : vector<1x128x10xf32> to vector<128x10xf32>
    %c0_2 = arith.constant 0 : index
    %c0_3 = arith.constant 0 : index
    %c0_4 = arith.constant 0 : index
    %2 = vector.load %arg3[%c0_2, %c0_3, %c0_4] : memref<1x10x128xf32, #tpu.memory_space<vmem>>, vector<1x10x128xf32>
    %3 = vector.shape_cast %2 : vector<1x10x128xf32> to vector<10x128xf32>
    %cst = arith.constant dense<0.000000e+00> : vector<128x128xf32>
    %4 = tpu.matmul %1, %3, %cst {dimension_numbers = #tpu.dot_dimension_numbers<[1], [0], [0], [1], [0, 0, 1, 1], [], []>, precision = #tpu.contract_precision<fp32>} : vector<128x10xf32>, vector<10x128xf32>, vector<128x128xf32> -> vector<128x128xf32>
    %5 = vector.shape_cast %4 : vector<128x128xf32> to vector<1x1x128x128xf32>
    %6 = vector.shape_cast %5 : vector<1x1x128x128xf32> to vector<1x1x128x128xf32>
    %7 = vector.broadcast %6 : vector<1x1x128x128xf32> to vector<1x8x128x128xf32>
    %c0_5 = arith.constant 0 : index
    %c0_6 = arith.constant 0 : index
    %c0_7 = arith.constant 0 : index
    %c0_8 = arith.constant 0 : index
    %8 = vector.load %arg4[%c0_5, %c0_6, %c0_7, %c0_8] : memref<1x8x128x128xf32, #tpu.memory_space<vmem>>, vector<1x8x128x128xf32>
    tpu.vector_store %arg4[%c0_5, %c0_6, %c0_7, %c0_8], %7 {strides = array<i32>} : memref<1x8x128x128xf32, #tpu.memory_space<vmem>>, vector<1x8x128x128xf32>,
    return
  }
  func.func @transform_0(%arg0: i32, %arg1: i32) -> (i32, i32, i32) {
    %c0_i32 = arith.constant 0 : i32
    %c0_i32_0 = arith.constant 0 : i32
    %c0_i32_1 = arith.constant 0 : i32
    return %arg0, %c0_i32, %c0_i32_0 : i32, i32, i32
  }
  func.func @transform_1(%arg0: i32, %arg1: i32) -> (i32, i32, i32) {
    %c0_i32 = arith.constant 0 : i32
    %c0_i32_0 = arith.constant 0 : i32
    %c0_i32_1 = arith.constant 0 : i32
    return %arg0, %c0_i32, %c0_i32_0 : i32, i32, i32
  }
  func.func @transform_2(%arg0: i32, %arg1: i32) -> (i32, i32, i32, i32) {
    %c0_i32 = arith.constant 0 : i32
    %c0_i32_0 = arith.constant 0 : i32
    %c0_i32_1 = arith.constant 0 : i32
    return %arg0, %arg1, %c0_i32, %c0_i32_0 : i32, i32, i32, i32
  }
}

</mosaic_0001>

<llo_original>
// kernel: tpu_custom_call.1
$region0: #{tpu_custom_call.1}
  #allocation0 [shape = 'u32[]', space=smem, size = 0x4, offset = 0x4, fixed_abs, tag = 'smem constant byte address 0x4 - core index']
  #allocation1 [shape = 'u32[144,128]{1,0:T(1,128)}', space=vmem, size = 0x12000, scoped, tag = 'internal scratch']
  %s0 = inlined_call_operand.vmem [shape: f32[2,128,10], index: 0, kind: input, shape index: {}]
  %s1 = inlined_call_operand.vmem [shape: f32[2,10,128], index: 1, kind: input, shape index: {}]
  %s2 = inlined_call_operand.hbm [shape: f32[2,8,128,128], index: 2, kind: output, shape index: {}]
  %s3 = sld [smem:[#allocation0]]
  $region41: #{tpu_custom_call.1} parent=0
    _
  %s5 = ssub.s32 1, %s3
  %s6 = scalar_select 0, %s5, %s3
  $region1: #{tpu_custom_call.1} parent=0
    #allocation2 [shape = 'u8[1048576]{0}', space=vmem, size = 0x100000, scoped, tag = 'output window, operand 0']
    #allocation3 [shape = 's32[2]{0}', space=sflag, size = 0x8, scoped, tag = 'scoped memory for tpu_custom_call.1']
    %7 = vsyncpa [#allocation3], 0
    %s8 = scalar_lea.sflag [#allocation3], 1
    %9 = vsyncpa %s8, 0
    loop: start=0, step=1, limit=4
    $region2: #{tpu_custom_call.1} parent=1 // loop_pre_header
      _
    $region3: #{tpu_custom_call.1} parent=1 // loop_header
      %s11 = sphi 0, %s15
      %p12 = scmp.ge.s32.totalorder %s11, 4
      %s18 = sphi 0, %s30
      %s19 = sphi 0, %s26
      %s20 = sphi 0, %s18
      %s21 = sphi 0, %s19
      %s22 = sphi 0, %s20
      %s23 = sphi 0, %s21
      %s33 = sphi 0, %s35
      %s36 = sphi 0, %s33
      %s37 = sphi 0, %s36
      %s53 = sphi 0, %s37
      %s59 = sphi 0, %s61
      %s62 = sphi 0, %s59
      %s63 = sphi 0, %s62
      %s79 = sphi 0, %s63
      %s87 = sphi 0, %s89
      %s90 = sphi 0, %s87
      %s91 = sphi 0, %s90
      %s107 = sphi 0, %s91
    $region4: #{tpu_custom_call.1} parent=1 // loop_header_branch
      %14 = sbr.rel (%p12) target = $region8
    $region5: #{tpu_custom_call.1} parent=1 // loop_body
      %s16 = ssub.s32 %s11, 1
      %s17 = ssub.s32 %s11, 2
      %s24 = sadd.s32 1, %s19
      %p25 = scmp.ge.s32.totalorder %s24, 1
      %s26 = scalar_select %p25, 0, %s24
      %s27 = sadd.s32 1, %s18
      %s28 = scalar_select %p25, %s27, %s18
      %p29 = scmp.ge.s32.totalorder %s28, 2
      %s30 = scalar_select %p29, 0, %s28
      %s31 = ssub.s32 %s18, %s30
      %p32 = scmp.eq.s32.totalorder %s31, 0
      %s34 = sadd.s32 %s33, 1
      %s35 = scalar_select %p32, %s33, %s34
      %p38 = pneg %p32
      %p39 = scmp.eq.s32.totalorder %s11, 1
      %p40 = por %p38, %p39
      %p41 = scmp.ne.s32.totalorder %s33, %s36
      %p42 = scmp.eq.s32.totalorder %s11, 0
      %p43 = por %p41, %p42
      %p44 = scmp.ne.s32.totalorder %s33, %s36
      %p45 = scmp.eq.s32.totalorder %s16, 1
      %p46 = por %p44, %p45
      %p47 = scmp.ne.s32.totalorder %s36, %s37
      %p48 = scmp.eq.s32.totalorder %s16, 0
      %p49 = por %p47, %p48
      %p50 = scmp.ne.s32.totalorder %s36, %s37
      %p51 = scmp.eq.s32.totalorder %s17, 1
      %p52 = por %p50, %p51
      %p54 = scmp.ne.s32.totalorder %s37, %s53
      %p55 = scmp.eq.s32.totalorder %s17, 0
      %p56 = por %p54, %p55
      %s57 = ssub.s32 %s18, %s30
      %p58 = scmp.eq.s32.totalorder %s57, 0
      %s60 = sadd.s32 %s59, 1
      %s61 = scalar_select %p58, %s59, %s60
      %p64 = pneg %p58
      %p65 = scmp.eq.s32.totalorder %s11, 1
      %p66 = por %p64, %p65
      %p67 = scmp.ne.s32.totalorder %s59, %s62
      %p68 = scmp.eq.s32.totalorder %s11, 0
      %p69 = por %p67, %p68
      %p70 = scmp.ne.s32.totalorder %s59, %s62
      %p71 = scmp.eq.s32.totalorder %s16, 1
      %p72 = por %p70, %p71
      %p73 = scmp.ne.s32.totalorder %s62, %s63
      %p74 = scmp.eq.s32.totalorder %s16, 0
      %p75 = por %p73, %p74
      %p76 = scmp.ne.s32.totalorder %s62, %s63
      %p77 = scmp.eq.s32.totalorder %s17, 1
      %p78 = por %p76, %p77
      %p80 = scmp.ne.s32.totalorder %s63, %s79
      %p81 = scmp.eq.s32.totalorder %s17, 0
      %p82 = por %p80, %p81
      %s83 = ssub.s32 %s18, %s30
      %s84 = ssub.s32 %s19, %s26
      %s85 = sor.u32 %s83, %s84
      %p86 = scmp.eq.s32.totalorder %s85, 0
      %s88 = sadd.s32 %s87, 1
      %s89 = scalar_select %p86, %s87, %s88
      %p92 = pneg %p86
      %p93 = scmp.eq.s32.totalorder %s11, 1
      %p94 = por %p92, %p93
      %p95 = scmp.ne.s32.totalorder %s87, %s90
      %p96 = scmp.eq.s32.totalorder %s11, 0
      %p97 = por %p95, %p96
      %p98 = scmp.ne.s32.totalorder %s87, %s90
      %p99 = scmp.eq.s32.totalorder %s16, 1
      %p100 = por %p98, %p99
      %p101 = scmp.ne.s32.totalorder %s90, %s91
      %p102 = scmp.eq.s32.totalorder %s16, 0
      %p103 = por %p101, %p102
      %p104 = scmp.ne.s32.totalorder %s90, %s91
      %p105 = scmp.eq.s32.totalorder %s17, 1
      %p106 = por %p104, %p105
      %p108 = scmp.ne.s32.totalorder %s91, %s107
      %p109 = scmp.eq.s32.totalorder %s17, 0
      %p110 = por %p108, %p109
      %p111 = scmp.le.s32.totalorder 1, %s11
      %p112 = scmp.lt.s32.totalorder %s11, 3
      %p113 = pnand %p111, %p112
      %p114 = pneg %p113
      // Predicated region
      $region9: #{tpu_custom_call.1} parent=5 // pred_check
        _
      $region10: #{tpu_custom_call.1} parent=5 // pred_check_branch
        %116 = sbr.rel (%p113) target = $region12
      $region11: #{tpu_custom_call.1} parent=5 // pred_region
        %s117 = ssub.s32 %s11, 1
      $region12: #{tpu_custom_call.1} parent=5 // pred_fallthru
        _
      %p118 = scmp.lt.s32.totalorder %s11, 2
      // Predicated region
      $region13: #{tpu_custom_call.1} parent=5 // pred_check
        %p119 = pneg %p118
      $region14: #{tpu_custom_call.1} parent=5 // pred_check_branch
        %121 = sbr.rel (%p119) target = $region16
      $region15: #{tpu_custom_call.1} parent=5 // pred_region
        // Predicated region
        $region17: #{tpu_custom_call.1} parent=15 // pred_check
          %p122 = pneg %p43
        $region18: #{tpu_custom_call.1} parent=15 // pred_check_branch
          %124 = sbr.rel (%p122) target = $region20
        $region19: #{tpu_custom_call.1} parent=15 // pred_region
          %p125 = scmp.lt.s32.totalorder %s18, 1
          %s126 = scalar_select %p125, %s18, 1
          %s127 = smul.addr %s126, 16
          %s128 = smul.addr %s127, 8
          %s129 = scalar_lea.vmem %s0, %s128
        $region20: #{tpu_custom_call.1} parent=15 // pred_fallthru
          _
        // Predicated region
        $region21: #{tpu_custom_call.1} parent=15 // pred_check
          %p130 = pneg %p69
        $region22: #{tpu_custom_call.1} parent=15 // pred_check_branch
          %132 = sbr.rel (%p130) target = $region24
        $region23: #{tpu_custom_call.1} parent=15 // pred_region
          %p133 = scmp.lt.s32.totalorder %s18, 1
          %s134 = scalar_select %p133, %s18, 1
          %s135 = smul.addr %s134, 2
          %s136 = smul.addr %s135, 8
          %s137 = scalar_lea.vmem %s1, %s136
        $region24: #{tpu_custom_call.1} parent=15 // pred_fallthru
          _
      $region16: #{tpu_custom_call.1} parent=5 // pred_fallthru
        _
      %p138 = scmp.le.s32.totalorder 1, %s11
      %p139 = scmp.lt.s32.totalorder %s11, 3
      %p140 = pnand %p138, %p139
      %p141 = pneg %p140
      // Predicated region
      $region25: #{tpu_custom_call.1} parent=5 // pred_check
        _
      $region26: #{tpu_custom_call.1} parent=5 // pred_check_branch
        %143 = sbr.rel (%p140) target = $region28
      $region27: #{tpu_custom_call.1} parent=5 // pred_region
        %s144 = ssub.s32 %s11, 1
        %p145 = scmp.lt.s32.totalorder %s20, 1
        %s146 = scalar_select %p145, %s20, 1
        %s147 = smul.addr %s146, 16
        %s148 = smul.addr %s147, 8
        %s149 = scalar_lea.vmem %s0, %s148
        %p150 = pneg %p49
        %p151 = pneg %p46
        %p152 = scmp.lt.s32.totalorder %s20, 1
        %s153 = scalar_select %p152, %s20, 1
        %s154 = smul.addr %s153, 2
        %s155 = smul.addr %s154, 8
        %s156 = scalar_lea.vmem %s1, %s155
        %p157 = pneg %p75
        %p158 = pneg %p72
        %p159 = pneg %p103
        %p160 = pneg %p100
        %s161 = sand.u32 %s90, 1
        %s162 = scalar_lea.sflag [#allocation3], %s161
        %s163 = sand.u32 %s90, 1
        %s164 = smul.addr %s163, 1024
        %s165 = scalar_lea.vmem [#allocation2], %s164
        %p166 = scmp.lt.s32.totalorder %s20, 1
        %s167 = scalar_select %p166, %s20, 1
        %s168 = smul.addr %s167, 16
        %s169 = smul.addr %s168, 8
        %s170 = scalar_lea.vmem %s0, %s169
        %p171 = scmp.lt.s32.totalorder %s20, 1
        %s172 = scalar_select %p171, %s20, 1
        %s173 = smul.addr %s172, 2
        %s174 = smul.addr %s173, 8
        %s175 = scalar_lea.vmem %s1, %s174
        %s176 = smul.u32 8, %s21
        %v177 = vld [vmem:[%s170] sm:$0xff]
        %v178 = vld [vmem:[%s170 + $0x8] sm:$0xff]
        %v179 = vld [vmem:[%s170 + $0x10] sm:$0xff]
        %v180 = vld [vmem:[%s170 + $0x18] sm:$0xff]
        %v181 = vld [vmem:[%s170 + $0x20] sm:$0xff]
        %v182 = vld [vmem:[%s170 + $0x28] sm:$0xff]
        %v183 = vld [vmem:[%s170 + $0x30] sm:$0xff]
        %v184 = vld [vmem:[%s170 + $0x38] sm:$0xff]
        %v185 = vld [vmem:[%s170 + $0x40] sm:$0xff]
        %v186 = vld [vmem:[%s170 + $0x48] sm:$0xff]
        %v187 = vld [vmem:[%s170 + $0x50] sm:$0xff]
        %v188 = vld [vmem:[%s170 + $0x58] sm:$0xff]
        %v189 = vld [vmem:[%s170 + $0x60] sm:$0xff]
        %v190 = vld [vmem:[%s170 + $0x68] sm:$0xff]
        %v191 = vld [vmem:[%s170 + $0x70] sm:$0xff]
        %v192 = vld [vmem:[%s170 + $0x78] sm:$0xff]
        %v193 = vld [vmem:[%s175] sm:$0xff]
        %v194 = vld [vmem:[%s175 + $0x8] sm:$0x3]
        %vm195 = vcmask 80896
        %v197 = vsel %vm195, %v177, 0
        %v200 = vsel %vm195, %v178, 0
        %v203 = vsel %vm195, %v179, 0
        %v206 = vsel %vm195, %v180, 0
        %v209 = vsel %vm195, %v181, 0
        %v212 = vsel %vm195, %v182, 0
        %v215 = vsel %vm195, %v183, 0
        %v218 = vsel %vm195, %v184, 0
        %v221 = vsel %vm195, %v185, 0
        %v224 = vsel %vm195, %v186, 0
        %v227 = vsel %vm195, %v187, 0
        %v230 = vsel %vm195, %v188, 0
        %v233 = vsel %vm195, %v189, 0
        %v236 = vsel %vm195, %v190, 0
        %v239 = vsel %vm195, %v191, 0
        %v242 = vsel %vm195, %v192, 0
        %vm244 = vcmask 1041408
        %v246 = vsel %vm244, %v194, 0
        %248 = vmatprep.subr.mxu0 0.0
        %249 = vmatpush1.msra.mxu0 0.0
        %250 = vmatprep.subr.mxu0 0.0
        %251 = vmatpush1.msra.mxu0 0.0
        %252 = vmatprep.subr.mxu0 0.0
        %253 = vmatpush1.msra.mxu0 0.0
        %254 = vmatprep.subr.mxu0 0.0
        %255 = vmatpush1.msra.mxu0 0.0
        %256 = vmatprep.subr.mxu0 0.0
        %257 = vmatpush1.msra.mxu0 0.0
        %258 = vmatprep.subr.mxu0 0.0
        %259 = vmatpush1.msra.mxu0 0.0
        %260 = vmatprep.subr.mxu0 0.0
        %261 = vmatpush1.msra.mxu0 0.0
        %262 = vmatprep.subr.mxu0 0.0
        %263 = vmatpush1.msra.mxu0 0.0
        %264 = vmatprep.subr.mxu0 0.0
        %265 = vmatpush1.msra.mxu0 0.0
        %266 = vmatprep.subr.mxu0 0.0
        %267 = vmatpush1.msra.mxu0 0.0
        %268 = vmatprep.subr.mxu0 0.0
        %269 = vmatpush1.msra.mxu0 0.0
        %270 = vmatprep.subr.mxu0 0.0
        %271 = vmatpush1.msra.mxu0 0.0
        %272 = vmatprep.subr.mxu0 0.0
        %273 = vmatpush1.msra.mxu0 0.0
        %274 = vmatprep.subr.mxu0 0.0
        %275 = vmatpush1.msra.mxu0 0.0
        %276 = vmatprep.subr.mxu0 0.0
        %v277 = vand.u32 %v246, 4294901760
        %278 = vmatpush1.msra.mxu0 %v277
        %279 = vmatprep.subr.mxu0 0.0
        %v280 = vand.u32 %v193, 4294901760
        %281 = vmatpush1.msra.mxu0 %v280
        %282 = vmatprep.subr.mxu0 0.0
        %283 = vmatpush2.msra.mxu0 0.0
        %284 = vmatprep.subr.mxu0 0.0
        %285 = vmatpush2.msra.mxu0 0.0
        %286 = vmatprep.subr.mxu0 0.0
        %287 = vmatpush2.msra.mxu0 0.0
        %288 = vmatprep.subr.mxu0 0.0
        %289 = vmatpush2.msra.mxu0 0.0
        %290 = vmatprep.subr.mxu0 0.0
        %291 = vmatpush2.msra.mxu0 0.0
        %292 = vmatprep.subr.mxu0 0.0
        %293 = vmatpush2.msra.mxu0 0.0
        %294 = vmatprep.subr.mxu0 0.0
        %295 = vmatpush2.msra.mxu0 0.0
        %296 = vmatprep.subr.mxu0 0.0
        %297 = vmatpush2.msra.mxu0 0.0
        %298 = vmatprep.subr.mxu0 0.0
        %299 = vmatpush2.msra.mxu0 0.0
        %300 = vmatprep.subr.mxu0 0.0
        %301 = vmatpush2.msra.mxu0 0.0
        %302 = vmatprep.subr.mxu0 0.0
        %303 = vmatpush2.msra.mxu0 0.0
        %304 = vmatprep.subr.mxu0 0.0
        %305 = vmatpush2.msra.mxu0 0.0
        %306 = vmatprep.subr.mxu0 0.0
        %307 = vmatpush2.msra.mxu0 0.0
        %308 = vmatprep.subr.mxu0 0.0
        %309 = vmatpush2.msra.mxu0 0.0
        %310 = vmatprep.subr.mxu0 0.0
        %311 = vmatpush2.msra.mxu0 0.0
        %312 = vmatprep.subr.mxu0 0.0
        %313 = vmatpush2.msra.mxu0 0.0
        %314 = vmatprep.mubr.f32.mxu0 0.0
        %v315 = vand.u32 %v197, 4294901760
        %v316 = vsub.f32 %v197, %v315
        %v317 = vand.u32 %v316, 4294901760
        %v318 = vsub.f32 %v316, %v317
        %v319 = vand.u32 %v318, 4294901760
        %320 = vmatmul.mubr.f32.gmra.mxu0 %v319
        %v321 = vpop.f32.mrf.mxu0
        %v322 = vadd.f32 0.0, %v321
        %v323 = vpop.f32.mrf.mxu0
        %324 = vmatprep.mubr.f32.mxu0 0.0
        %v325 = vand.u32 %v200, 4294901760
        %v326 = vsub.f32 %v200, %v325
        %v327 = vand.u32 %v326, 4294901760
        %v328 = vsub.f32 %v326, %v327
        %v329 = vand.u32 %v328, 4294901760
        %330 = vmatmul.mubr.f32.gmra.mxu0 %v329
        %v331 = vpop.f32.mrf.mxu0
        %v332 = vadd.f32 0.0, %v331
        %v333 = vpop.f32.mrf.mxu0
        %334 = vmatprep.mubr.f32.mxu0 0.0
        %v335 = vand.u32 %v203, 4294901760
        %v336 = vsub.f32 %v203, %v335
        %v337 = vand.u32 %v336, 4294901760
        %v338 = vsub.f32 %v336, %v337
        %v339 = vand.u32 %v338, 4294901760
        %340 = vmatmul.mubr.f32.gmra.mxu0 %v339
        %v341 = vpop.f32.mrf.mxu0
        %v342 = vadd.f32 0.0, %v341
        %v343 = vpop.f32.mrf.mxu0
        %344 = vmatprep.mubr.f32.mxu0 0.0
        %v345 = vand.u32 %v206, 4294901760
        %v346 = vsub.f32 %v206, %v345
        %v347 = vand.u32 %v346, 4294901760
        %v348 = vsub.f32 %v346, %v347
        %v349 = vand.u32 %v348, 4294901760
        %350 = vmatmul.mubr.f32.gmra.mxu0 %v349
        %v351 = vpop.f32.mrf.mxu0
        %v352 = vadd.f32 0.0, %v351
        %v353 = vpop.f32.mrf.mxu0
        %354 = vmatprep.mubr.f32.mxu0 0.0
        %v355 = vand.u32 %v209, 4294901760
        %v356 = vsub.f32 %v209, %v355
        %v357 = vand.u32 %v356, 4294901760
        %v358 = vsub.f32 %v356, %v357
        %v359 = vand.u32 %v358, 4294901760
        %360 = vmatmul.mubr.f32.gmra.mxu0 %v359
        %v361 = vpop.f32.mrf.mxu0
        %v362 = vadd.f32 0.0, %v361
        %v363 = vpop.f32.mrf.mxu0
        %364 = vmatprep.mubr.f32.mxu0 0.0
        %v365 = vand.u32 %v212, 4294901760
        %v366 = vsub.f32 %v212, %v365
        %v367 = vand.u32 %v366, 4294901760
        %v368 = vsub.f32 %v366, %v367
        %v369 = vand.u32 %v368, 4294901760
        %370 = vmatmul.mubr.f32.gmra.mxu0 %v369
        %v371 = vpop.f32.mrf.mxu0
        %v372 = vadd.f32 0.0, %v371
        %v373 = vpop.f32.mrf.mxu0
        %374 = vmatprep.mubr.f32.mxu0 0.0
        %v375 = vand.u32 %v215, 4294901760
        %v376 = vsub.f32 %v215, %v375
        %v377 = vand.u32 %v376, 4294901760
        %v378 = vsub.f32 %v376, %v377
        %v379 = vand.u32 %v378, 4294901760
        %380 = vmatmul.mubr.f32.gmra.mxu0 %v379
        %v381 = vpop.f32.mrf.mxu0
        %v382 = vadd.f32 0.0, %v381
        %v383 = vpop.f32.mrf.mxu0
        %384 = vmatprep.mubr.f32.mxu0 0.0
        %v385 = vand.u32 %v218, 4294901760
        %v386 = vsub.f32 %v218, %v385
        %v387 = vand.u32 %v386, 4294901760
        %v388 = vsub.f32 %v386, %v387
        %v389 = vand.u32 %v388, 4294901760
        %390 = vmatmul.mubr.f32.gmra.mxu0 %v389
        %v391 = vpop.f32.mrf.mxu0
        %v392 = vadd.f32 0.0, %v391
        %v393 = vpop.f32.mrf.mxu0
        %394 = vmatprep.mubr.f32.mxu0 0.0
        %v395 = vand.u32 %v221, 4294901760
        %v396 = vsub.f32 %v221, %v395
        %v397 = vand.u32 %v396, 4294901760
        %v398 = vsub.f32 %v396, %v397
        %v399 = vand.u32 %v398, 4294901760
        %400 = vmatmul.mubr.f32.gmra.mxu0 %v399
        %v401 = vpop.f32.mrf.mxu0
        %v402 = vadd.f32 0.0, %v401
        %v403 = vpop.f32.mrf.mxu0
        %404 = vmatprep.mubr.f32.mxu0 0.0
        %v405 = vand.u32 %v224, 4294901760
        %v406 = vsub.f32 %v224, %v405
        %v407 = vand.u32 %v406, 4294901760
        %v408 = vsub.f32 %v406, %v407
        %v409 = vand.u32 %v408, 4294901760
        %410 = vmatmul.mubr.f32.gmra.mxu0 %v409
        %v411 = vpop.f32.mrf.mxu0
        %v412 = vadd.f32 0.0, %v411
        %v413 = vpop.f32.mrf.mxu0
        %414 = vmatprep.mubr.f32.mxu0 0.0
        %v415 = vand.u32 %v227, 4294901760
        %v416 = vsub.f32 %v227, %v415
        %v417 = vand.u32 %v416, 4294901760
        %v418 = vsub.f32 %v416, %v417
        %v419 = vand.u32 %v418, 4294901760
        %420 = vmatmul.mubr.f32.gmra.mxu0 %v419
        %v421 = vpop.f32.mrf.mxu0
        %v422 = vadd.f32 0.0, %v421
        %v423 = vpop.f32.mrf.mxu0
        %424 = vmatprep.mubr.f32.mxu0 0.0
        %v425 = vand.u32 %v230, 4294901760
        %v426 = vsub.f32 %v230, %v425
        %v427 = vand.u32 %v426, 4294901760
        %v428 = vsub.f32 %v426, %v427
        %v429 = vand.u32 %v428, 4294901760
        %430 = vmatmul.mubr.f32.gmra.mxu0 %v429
        %v431 = vpop.f32.mrf.mxu0
        %v432 = vadd.f32 0.0, %v431
        %v433 = vpop.f32.mrf.mxu0
        %434 = vmatprep.mubr.f32.mxu0 0.0
        %v435 = vand.u32 %v233, 4294901760
        %v436 = vsub.f32 %v233, %v435
        %v437 = vand.u32 %v436, 4294901760
        %v438 = vsub.f32 %v436, %v437
        %v439 = vand.u32 %v438, 4294901760
        %440 = vmatmul.mubr.f32.gmra.mxu0 %v439
        %v441 = vpop.f32.mrf.mxu0
        %v442 = vadd.f32 0.0, %v441
        %v443 = vpop.f32.mrf.mxu0
        %444 = vmatprep.mubr.f32.mxu0 0.0
        %v445 = vand.u32 %v236, 4294901760
        %v446 = vsub.f32 %v236, %v445
        %v447 = vand.u32 %v446, 4294901760
        %v448 = vsub.f32 %v446, %v447
        %v449 = vand.u32 %v448, 4294901760
        %450 = vmatmul.mubr.f32.gmra.mxu0 %v449
        %v451 = vpop.f32.mrf.mxu0
        %v452 = vadd.f32 0.0, %v451
        %v453 = vpop.f32.mrf.mxu0
        %454 = vmatprep.mubr.f32.mxu0 0.0
        %v455 = vand.u32 %v239, 4294901760
        %v456 = vsub.f32 %v239, %v455
        %v457 = vand.u32 %v456, 4294901760
        %v458 = vsub.f32 %v456, %v457
        %v459 = vand.u32 %v458, 4294901760
        %460 = vmatmul.mubr.f32.gmra.mxu0 %v459
        %v461 = vpop.f32.mrf.mxu0
        %v462 = vadd.f32 0.0, %v461
        %v463 = vpop.f32.mrf.mxu0
        %464 = vmatprep.mubr.f32.mxu0 0.0
        %v465 = vand.u32 %v242, 4294901760
        %v466 = vsub.f32 %v242, %v465
        %v467 = vand.u32 %v466, 4294901760
        %v468 = vsub.f32 %v466, %v467
        %v469 = vand.u32 %v468, 4294901760
        %470 = vmatmul.mubr.f32.gmra.mxu0 %v469
        %v471 = vpop.f32.mrf.mxu0
        %v472 = vadd.f32 0.0, %v471
        %v473 = vpop.f32.mrf.mxu0
        %474 = vdwg.mxu0
        %475 = vmatprep.subr.mxu0 0.0
        %476 = vmatpush1.msra.mxu0 0.0
        %477 = vmatprep.subr.mxu0 0.0
        %478 = vmatpush1.msra.mxu0 0.0
        %479 = vmatprep.subr.mxu0 0.0
        %480 = vmatpush1.msra.mxu0 0.0
        %481 = vmatprep.subr.mxu0 0.0
        %482 = vmatpush1.msra.mxu0 0.0
        %483 = vmatprep.subr.mxu0 0.0
        %484 = vmatpush1.msra.mxu0 0.0
        %485 = vmatprep.subr.mxu0 0.0
        %486 = vmatpush1.msra.mxu0 0.0
        %487 = vmatprep.subr.mxu0 0.0
        %488 = vmatpush1.msra.mxu0 0.0
        %489 = vmatprep.subr.mxu0 0.0
        %490 = vmatpush1.msra.mxu0 0.0
        %491 = vmatprep.subr.mxu0 0.0
        %492 = vmatpush1.msra.mxu0 0.0
        %493 = vmatprep.subr.mxu0 0.0
        %494 = vmatpush1.msra.mxu0 0.0
        %495 = vmatprep.subr.mxu0 0.0
        %496 = vmatpush1.msra.mxu0 0.0
        %497 = vmatprep.subr.mxu0 0.0
        %498 = vmatpush1.msra.mxu0 0.0
        %499 = vmatprep.subr.mxu0 0.0
        %500 = vmatpush1.msra.mxu0 0.0
        %501 = vmatprep.subr.mxu0 0.0
        %502 = vmatpush1.msra.mxu0 0.0
        %503 = vmatprep.subr.mxu0 0.0
        %v504 = vand.u32 %v246, 4294901760
        %v505 = vsub.f32 %v246, %v504
        %v506 = vand.u32 %v505, 4294901760
        %v507 = vsub.f32 %v505, %v506
        %v508 = vand.u32 %v507, 4294901760
        %509 = vmatpush1.msra.mxu0 %v508
        %510 = vmatprep.subr.mxu0 0.0
        %v511 = vand.u32 %v193, 4294901760
        %v512 = vsub.f32 %v193, %v511
        %v513 = vand.u32 %v512, 4294901760
        %v514 = vsub.f32 %v512, %v513
        %v515 = vand.u32 %v514, 4294901760
        %516 = vmatpush1.msra.mxu0 %v515
        %517 = vmatprep.subr.mxu0 0.0
        %518 = vmatpush2.msra.mxu0 0.0
        %519 = vmatprep.subr.mxu0 0.0
        %520 = vmatpush2.msra.mxu0 0.0
        %521 = vmatprep.subr.mxu0 0.0
        %522 = vmatpush2.msra.mxu0 0.0
        %523 = vmatprep.subr.mxu0 0.0
        %524 = vmatpush2.msra.mxu0 0.0
        %525 = vmatprep.subr.mxu0 0.0
        %526 = vmatpush2.msra.mxu0 0.0
        %527 = vmatprep.subr.mxu0 0.0
        %528 = vmatpush2.msra.mxu0 0.0
        %529 = vmatprep.subr.mxu0 0.0
        %530 = vmatpush2.msra.mxu0 0.0
        %531 = vmatprep.subr.mxu0 0.0
        %532 = vmatpush2.msra.mxu0 0.0
        %533 = vmatprep.subr.mxu0 0.0
        %534 = vmatpush2.msra.mxu0 0.0
        %535 = vmatprep.subr.mxu0 0.0
        %536 = vmatpush2.msra.mxu0 0.0
        %537 = vmatprep.subr.mxu0 0.0
        %538 = vmatpush2.msra.mxu0 0.0
        %539 = vmatprep.subr.mxu0 0.0
        %540 = vmatpush2.msra.mxu0 0.0
        %541 = vmatprep.subr.mxu0 0.0
        %542 = vmatpush2.msra.mxu0 0.0
        %543 = vmatprep.subr.mxu0 0.0
        %544 = vmatpush2.msra.mxu0 0.0
        %545 = vmatprep.subr.mxu0 0.0
        %546 = vmatpush2.msra.mxu0 0.0
        %547 = vmatprep.subr.mxu0 0.0
        %548 = vmatpush2.msra.mxu0 0.0
        %549 = vmatprep.mubr.f32.mxu0 0.0
        %v550 = vand.u32 %v197, 4294901760
        %551 = vmatmul.mubr.f32.gmra.mxu0 %v550
        %v552 = vpop.f32.mrf.mxu0
        %v553 = vadd.f32 %v322, %v552
        %v554 = vpop.f32.mrf.mxu0
        %555 = vmatprep.mubr.f32.mxu0 0.0
        %v556 = vand.u32 %v200, 4294901760
        %557 = vmatmul.mubr.f32.gmra.mxu0 %v556
        %v558 = vpop.f32.mrf.mxu0
        %v559 = vadd.f32 %v332, %v558
        %v560 = vpop.f32.mrf.mxu0
        %561 = vmatprep.mubr.f32.mxu0 0.0
        %v562 = vand.u32 %v203, 4294901760
        %563 = vmatmul.mubr.f32.gmra.mxu0 %v562
        %v564 = vpop.f32.mrf.mxu0
        %v565 = vadd.f32 %v342, %v564
        %v566 = vpop.f32.mrf.mxu0
        %567 = vmatprep.mubr.f32.mxu0 0.0
        %v568 = vand.u32 %v206, 4294901760
        %569 = vmatmul.mubr.f32.gmra.mxu0 %v568
        %v570 = vpop.f32.mrf.mxu0
        %v571 = vadd.f32 %v352, %v570
        %v572 = vpop.f32.mrf.mxu0
        %573 = vmatprep.mubr.f32.mxu0 0.0
        %v574 = vand.u32 %v209, 4294901760
        %575 = vmatmul.mubr.f32.gmra.mxu0 %v574
        %v576 = vpop.f32.mrf.mxu0
        %v577 = vadd.f32 %v362, %v576
        %v578 = vpop.f32.mrf.mxu0
        %579 = vmatprep.mubr.f32.mxu0 0.0
        %v580 = vand.u32 %v212, 4294901760
        %581 = vmatmul.mubr.f32.gmra.mxu0 %v580
        %v582 = vpop.f32.mrf.mxu0
        %v583 = vadd.f32 %v372, %v582
        %v584 = vpop.f32.mrf.mxu0
        %585 = vmatprep.mubr.f32.mxu0 0.0
        %v586 = vand.u32 %v215, 4294901760
        %587 = vmatmul.mubr.f32.gmra.mxu0 %v586
        %v588 = vpop.f32.mrf.mxu0
        %v589 = vadd.f32 %v382, %v588
        %v590 = vpop.f32.mrf.mxu0
        %591 = vmatprep.mubr.f32.mxu0 0.0
        %v592 = vand.u32 %v218, 4294901760
        %593 = vmatmul.mubr.f32.gmra.mxu0 %v592
        %v594 = vpop.f32.mrf.mxu0
        %v595 = vadd.f32 %v392, %v594
        %v596 = vpop.f32.mrf.mxu0
        %597 = vmatprep.mubr.f32.mxu0 0.0
        %v598 = vand.u32 %v221, 4294901760
        %599 = vmatmul.mubr.f32.gmra.mxu0 %v598
        %v600 = vpop.f32.mrf.mxu0
        %v601 = vadd.f32 %v402, %v600
        %v602 = vpop.f32.mrf.mxu0
        %603 = vmatprep.mubr.f32.mxu0 0.0
        %v604 = vand.u32 %v224, 4294901760
        %605 = vmatmul.mubr.f32.gmra.mxu0 %v604
        %v606 = vpop.f32.mrf.mxu0
        %v607 = vadd.f32 %v412, %v606
        %v608 = vpop.f32.mrf.mxu0
        %609 = vmatprep.mubr.f32.mxu0 0.0
        %v610 = vand.u32 %v227, 4294901760
        %611 = vmatmul.mubr.f32.gmra.mxu0 %v610
        %v612 = vpop.f32.mrf.mxu0
        %v613 = vadd.f32 %v422, %v612
        %v614 = vpop.f32.mrf.mxu0
        %615 = vmatprep.mubr.f32.mxu0 0.0
        %v616 = vand.u32 %v230, 4294901760
        %617 = vmatmul.mubr.f32.gmra.mxu0 %v616
        %v618 = vpop.f32.mrf.mxu0
        %v619 = vadd.f32 %v432, %v618
        %v620 = vpop.f32.mrf.mxu0
        %621 = vmatprep.mubr.f32.mxu0 0.0
        %v622 = vand.u32 %v233, 4294901760
        %623 = vmatmul.mubr.f32.gmra.mxu0 %v622
        %v624 = vpop.f32.mrf.mxu0
        %v625 = vadd.f32 %v442, %v624
        %v626 = vpop.f32.mrf.mxu0
        %627 = vmatprep.mubr.f32.mxu0 0.0
        %v628 = vand.u32 %v236, 4294901760
        %629 = vmatmul.mubr.f32.gmra.mxu0 %v628
        %v630 = vpop.f32.mrf.mxu0
        %v631 = vadd.f32 %v452, %v630
        %v632 = vpop.f32.mrf.mxu0
        %633 = vmatprep.mubr.f32.mxu0 0.0
        %v634 = vand.u32 %v239, 4294901760
        %635 = vmatmul.mubr.f32.gmra.mxu0 %v634
        %v636 = vpop.f32.mrf.mxu0
        %v637 = vadd.f32 %v462, %v636
        %v638 = vpop.f32.mrf.mxu0
        %639 = vmatprep.mubr.f32.mxu0 0.0
        %v640 = vand.u32 %v242, 4294901760
        %641 = vmatmul.mubr.f32.gmra.mxu0 %v640
        %v642 = vpop.f32.mrf.mxu0
        %v643 = vadd.f32 %v472, %v642
        %v644 = vpop.f32.mrf.mxu0
        %645 = vdwg.mxu0
        %646 = vmatprep.subr.mxu0 0.0
        %647 = vmatpush1.msra.mxu0 0.0
        %648 = vmatprep.subr.mxu0 0.0
        %649 = vmatpush1.msra.mxu0 0.0
        %650 = vmatprep.subr.mxu0 0.0
        %651 = vmatpush1.msra.mxu0 0.0
        %652 = vmatprep.subr.mxu0 0.0
        %653 = vmatpush1.msra.mxu0 0.0
        %654 = vmatprep.subr.mxu0 0.0
        %655 = vmatpush1.msra.mxu0 0.0
        %656 = vmatprep.subr.mxu0 0.0
        %657 = vmatpush1.msra.mxu0 0.0
        %658 = vmatprep.subr.mxu0 0.0
        %659 = vmatpush1.msra.mxu0 0.0
        %660 = vmatprep.subr.mxu0 0.0
        %661 = vmatpush1.msra.mxu0 0.0
        %662 = vmatprep.subr.mxu0 0.0
        %663 = vmatpush1.msra.mxu0 0.0
        %664 = vmatprep.subr.mxu0 0.0
        %665 = vmatpush1.msra.mxu0 0.0
        %666 = vmatprep.subr.mxu0 0.0
        %667 = vmatpush1.msra.mxu0 0.0
        %668 = vmatprep.subr.mxu0 0.0
        %669 = vmatpush1.msra.mxu0 0.0
        %670 = vmatprep.subr.mxu0 0.0
        %671 = vmatpush1.msra.mxu0 0.0
        %672 = vmatprep.subr.mxu0 0.0
        %673 = vmatpush1.msra.mxu0 0.0
        %674 = vmatprep.subr.mxu0 0.0
        %v675 = vand.u32 %v246, 4294901760
        %v676 = vsub.f32 %v246, %v675
        %677 = vmatpush1.msra.mxu0 %v676
        %678 = vmatprep.subr.mxu0 0.0
        %v679 = vand.u32 %v193, 4294901760
        %v680 = vsub.f32 %v193, %v679
        %681 = vmatpush1.msra.mxu0 %v680
        %682 = vmatprep.subr.mxu0 0.0
        %683 = vmatpush2.msra.mxu0 0.0
        %684 = vmatprep.subr.mxu0 0.0
        %685 = vmatpush2.msra.mxu0 0.0
        %686 = vmatprep.subr.mxu0 0.0
        %687 = vmatpush2.msra.mxu0 0.0
        %688 = vmatprep.subr.mxu0 0.0
        %689 = vmatpush2.msra.mxu0 0.0
        %690 = vmatprep.subr.mxu0 0.0
        %691 = vmatpush2.msra.mxu0 0.0
        %692 = vmatprep.subr.mxu0 0.0
        %693 = vmatpush2.msra.mxu0 0.0
        %694 = vmatprep.subr.mxu0 0.0
        %695 = vmatpush2.msra.mxu0 0.0
        %696 = vmatprep.subr.mxu0 0.0
        %697 = vmatpush2.msra.mxu0 0.0
        %698 = vmatprep.subr.mxu0 0.0
        %699 = vmatpush2.msra.mxu0 0.0
        %700 = vmatprep.subr.mxu0 0.0
        %701 = vmatpush2.msra.mxu0 0.0
        %702 = vmatprep.subr.mxu0 0.0
        %703 = vmatpush2.msra.mxu0 0.0
        %704 = vmatprep.subr.mxu0 0.0
        %705 = vmatpush2.msra.mxu0 0.0
        %706 = vmatprep.subr.mxu0 0.0
        %707 = vmatpush2.msra.mxu0 0.0
        %708 = vmatprep.subr.mxu0 0.0
        %709 = vmatpush2.msra.mxu0 0.0
        %710 = vmatprep.subr.mxu0 0.0
        %711 = vmatpush2.msra.mxu0 0.0
        %712 = vmatprep.subr.mxu0 0.0
        %713 = vmatpush2.msra.mxu0 0.0
        %714 = vmatprep.mubr.f32.mxu0 0.0
        %v715 = vand.u32 %v197, 4294901760
        %v716 = vsub.f32 %v197, %v715
        %717 = vmatmul.mubr.f32.gmra.mxu0 %v716
        %v718 = vpop.f32.mrf.mxu0
        %v719 = vadd.f32 %v553, %v718
        %v720 = vpop.f32.mrf.mxu0
        %721 = vmatprep.mubr.f32.mxu0 0.0
        %v722 = vand.u32 %v200, 4294901760
        %v723 = vsub.f32 %v200, %v722
        %724 = vmatmul.mubr.f32.gmra.mxu0 %v723
        %v725 = vpop.f32.mrf.mxu0
        %v726 = vadd.f32 %v559, %v725
        %v727 = vpop.f32.mrf.mxu0
        %728 = vmatprep.mubr.f32.mxu0 0.0
        %v729 = vand.u32 %v203, 4294901760
        %v730 = vsub.f32 %v203, %v729
        %731 = vmatmul.mubr.f32.gmra.mxu0 %v730
        %v732 = vpop.f32.mrf.mxu0
        %v733 = vadd.f32 %v565, %v732
        %v734 = vpop.f32.mrf.mxu0
        %735 = vmatprep.mubr.f32.mxu0 0.0
        %v736 = vand.u32 %v206, 4294901760
        %v737 = vsub.f32 %v206, %v736
        %738 = vmatmul.mubr.f32.gmra.mxu0 %v737
        %v739 = vpop.f32.mrf.mxu0
        %v740 = vadd.f32 %v571, %v739
        %v741 = vpop.f32.mrf.mxu0
        %742 = vmatprep.mubr.f32.mxu0 0.0
        %v743 = vand.u32 %v209, 4294901760
        %v744 = vsub.f32 %v209, %v743
        %745 = vmatmul.mubr.f32.gmra.mxu0 %v744
        %v746 = vpop.f32.mrf.mxu0
        %v747 = vadd.f32 %v577, %v746
        %v748 = vpop.f32.mrf.mxu0
        %749 = vmatprep.mubr.f32.mxu0 0.0
        %v750 = vand.u32 %v212, 4294901760
        %v751 = vsub.f32 %v212, %v750
        %752 = vmatmul.mubr.f32.gmra.mxu0 %v751
        %v753 = vpop.f32.mrf.mxu0
        %v754 = vadd.f32 %v583, %v753
        %v755 = vpop.f32.mrf.mxu0
        %756 = vmatprep.mubr.f32.mxu0 0.0
        %v757 = vand.u32 %v215, 4294901760
        %v758 = vsub.f32 %v215, %v757
        %759 = vmatmul.mubr.f32.gmra.mxu0 %v758
        %v760 = vpop.f32.mrf.mxu0
        %v761 = vadd.f32 %v589, %v760
        %v762 = vpop.f32.mrf.mxu0
        %763 = vmatprep.mubr.f32.mxu0 0.0
        %v764 = vand.u32 %v218, 4294901760
        %v765 = vsub.f32 %v218, %v764
        %766 = vmatmul.mubr.f32.gmra.mxu0 %v765
        %v767 = vpop.f32.mrf.mxu0
        %v768 = vadd.f32 %v595, %v767
        %v769 = vpop.f32.mrf.mxu0
        %770 = vmatprep.mubr.f32.mxu0 0.0
        %v771 = vand.u32 %v221, 4294901760
        %v772 = vsub.f32 %v221, %v771
        %773 = vmatmul.mubr.f32.gmra.mxu0 %v772
        %v774 = vpop.f32.mrf.mxu0
        %v775 = vadd.f32 %v601, %v774
        %v776 = vpop.f32.mrf.mxu0
        %777 = vmatprep.mubr.f32.mxu0 0.0
        %v778 = vand.u32 %v224, 4294901760
        %v779 = vsub.f32 %v224, %v778
        %780 = vmatmul.mubr.f32.gmra.mxu0 %v779
        %v781 = vpop.f32.mrf.mxu0
        %v782 = vadd.f32 %v607, %v781
        %v783 = vpop.f32.mrf.mxu0
        %784 = vmatprep.mubr.f32.mxu0 0.0
        %v785 = vand.u32 %v227, 4294901760
        %v786 = vsub.f32 %v227, %v785
        %787 = vmatmul.mubr.f32.gmra.mxu0 %v786
        %v788 = vpop.f32.mrf.mxu0
        %v789 = vadd.f32 %v613, %v788
        %v790 = vpop.f32.mrf.mxu0
        %791 = vmatprep.mubr.f32.mxu0 0.0
        %v792 = vand.u32 %v230, 4294901760
        %v793 = vsub.f32 %v230, %v792
        %794 = vmatmul.mubr.f32.gmra.mxu0 %v793
        %v795 = vpop.f32.mrf.mxu0
        %v796 = vadd.f32 %v619, %v795
        %v797 = vpop.f32.mrf.mxu0
        %798 = vmatprep.mubr.f32.mxu0 0.0
        %v799 = vand.u32 %v233, 4294901760
        %v800 = vsub.f32 %v233, %v799
        %801 = vmatmul.mubr.f32.gmra.mxu0 %v800
        %v802 = vpop.f32.mrf.mxu0
        %v803 = vadd.f32 %v625, %v802
        %v804 = vpop.f32.mrf.mxu0
        %805 = vmatprep.mubr.f32.mxu0 0.0
        %v806 = vand.u32 %v236, 4294901760
        %v807 = vsub.f32 %v236, %v806
        %808 = vmatmul.mubr.f32.gmra.mxu0 %v807
        %v809 = vpop.f32.mrf.mxu0
        %v810 = vadd.f32 %v631, %v809
        %v811 = vpop.f32.mrf.mxu0
        %812 = vmatprep.mubr.f32.mxu0 0.0
        %v813 = vand.u32 %v239, 4294901760
        %v814 = vsub.f32 %v239, %v813
        %815 = vmatmul.mubr.f32.gmra.mxu0 %v814
        %v816 = vpop.f32.mrf.mxu0
        %v817 = vadd.f32 %v637, %v816
        %v818 = vpop.f32.mrf.mxu0
        %819 = vmatprep.mubr.f32.mxu0 0.0
        %v820 = vand.u32 %v242, 4294901760
        %v821 = vsub.f32 %v242, %v820
        %822 = vmatmul.mubr.f32.gmra.mxu0 %v821
        %v823 = vpop.f32.mrf.mxu0
        %v824 = vadd.f32 %v643, %v823
        %v825 = vpop.f32.mrf.mxu0
        %826 = vdwg.mxu0
        %827 = vmatprep.subr.mxu0 0.0
        %828 = vmatpush1.msra.mxu0 0.0
        %829 = vmatprep.subr.mxu0 0.0
        %830 = vmatpush1.msra.mxu0 0.0
        %831 = vmatprep.subr.mxu0 0.0
        %832 = vmatpush1.msra.mxu0 0.0
        %833 = vmatprep.subr.mxu0 0.0
        %834 = vmatpush1.msra.mxu0 0.0
        %835 = vmatprep.subr.mxu0 0.0
        %836 = vmatpush1.msra.mxu0 0.0
        %837 = vmatprep.subr.mxu0 0.0
        %838 = vmatpush1.msra.mxu0 0.0
        %839 = vmatprep.subr.mxu0 0.0
        %840 = vmatpush1.msra.mxu0 0.0
        %841 = vmatprep.subr.mxu0 0.0
        %842 = vmatpush1.msra.mxu0 0.0
        %843 = vmatprep.subr.mxu0 0.0
        %844 = vmatpush1.msra.mxu0 0.0
        %845 = vmatprep.subr.mxu0 0.0
        %846 = vmatpush1.msra.mxu0 0.0
        %847 = vmatprep.subr.mxu0 0.0
        %848 = vmatpush1.msra.mxu0 0.0
        %849 = vmatprep.subr.mxu0 0.0
        %850 = vmatpush1.msra.mxu0 0.0
        %851 = vmatprep.subr.mxu0 0.0
        %852 = vmatpush1.msra.mxu0 0.0
        %853 = vmatprep.subr.mxu0 0.0
        %854 = vmatpush1.msra.mxu0 0.0
        %855 = vmatprep.subr.mxu0 0.0
        %v856 = vand.u32 %v246, 4294901760
        %857 = vmatpush1.msra.mxu0 %v856
        %858 = vmatprep.subr.mxu0 0.0
        %v859 = vand.u32 %v193, 4294901760
        %860 = vmatpush1.msra.mxu0 %v859
        %861 = vmatprep.subr.mxu0 0.0
        %862 = vmatpush2.msra.mxu0 0.0
        %863 = vmatprep.subr.mxu0 0.0
        %864 = vmatpush2.msra.mxu0 0.0
        %865 = vmatprep.subr.mxu0 0.0
        %866 = vmatpush2.msra.mxu0 0.0
        %867 = vmatprep.subr.mxu0 0.0
        %868 = vmatpush2.msra.mxu0 0.0
        %869 = vmatprep.subr.mxu0 0.0
        %870 = vmatpush2.msra.mxu0 0.0
        %871 = vmatprep.subr.mxu0 0.0
        %872 = vmatpush2.msra.mxu0 0.0
        %873 = vmatprep.subr.mxu0 0.0
        %874 = vmatpush2.msra.mxu0 0.0
        %875 = vmatprep.subr.mxu0 0.0
        %876 = vmatpush2.msra.mxu0 0.0
        %877 = vmatprep.subr.mxu0 0.0
        %878 = vmatpush2.msra.mxu0 0.0
        %879 = vmatprep.subr.mxu0 0.0
        %880 = vmatpush2.msra.mxu0 0.0
        %881 = vmatprep.subr.mxu0 0.0
        %882 = vmatpush2.msra.mxu0 0.0
        %883 = vmatprep.subr.mxu0 0.0
        %884 = vmatpush2.msra.mxu0 0.0
        %885 = vmatprep.subr.mxu0 0.0
        %886 = vmatpush2.msra.mxu0 0.0
        %887 = vmatprep.subr.mxu0 0.0
        %888 = vmatpush2.msra.mxu0 0.0
        %889 = vmatprep.subr.mxu0 0.0
        %890 = vmatpush2.msra.mxu0 0.0
        %891 = vmatprep.subr.mxu0 0.0
        %892 = vmatpush2.msra.mxu0 0.0
        %893 = vmatprep.mubr.f32.mxu0 0.0
        %v894 = vand.u32 %v197, 4294901760
        %v895 = vsub.f32 %v197, %v894
        %v896 = vand.u32 %v895, 4294901760
        %897 = vmatmul.mubr.f32.gmra.mxu0 %v896
        %v898 = vpop.f32.mrf.mxu0
        %v899 = vadd.f32 %v719, %v898
        %v900 = vpop.f32.mrf.mxu0
        %901 = vmatprep.mubr.f32.mxu0 0.0
        %v902 = vand.u32 %v200, 4294901760
        %v903 = vsub.f32 %v200, %v902
        %v904 = vand.u32 %v903, 4294901760
        %905 = vmatmul.mubr.f32.gmra.mxu0 %v904
        %v906 = vpop.f32.mrf.mxu0
        %v907 = vadd.f32 %v726, %v906
        %v908 = vpop.f32.mrf.mxu0
        %909 = vmatprep.mubr.f32.mxu0 0.0
        %v910 = vand.u32 %v203, 4294901760
        %v911 = vsub.f32 %v203, %v910
        %v912 = vand.u32 %v911, 4294901760
        %913 = vmatmul.mubr.f32.gmra.mxu0 %v912
        %v914 = vpop.f32.mrf.mxu0
        %v915 = vadd.f32 %v733, %v914
        %v916 = vpop.f32.mrf.mxu0
        %917 = vmatprep.mubr.f32.mxu0 0.0
        %v918 = vand.u32 %v206, 4294901760
        %v919 = vsub.f32 %v206, %v918
        %v920 = vand.u32 %v919, 4294901760
        %921 = vmatmul.mubr.f32.gmra.mxu0 %v920
        %v922 = vpop.f32.mrf.mxu0
        %v923 = vadd.f32 %v740, %v922
        %v924 = vpop.f32.mrf.mxu0
        %925 = vmatprep.mubr.f32.mxu0 0.0
        %v926 = vand.u32 %v209, 4294901760
        %v927 = vsub.f32 %v209, %v926
        %v928 = vand.u32 %v927, 4294901760
        %929 = vmatmul.mubr.f32.gmra.mxu0 %v928
        %v930 = vpop.f32.mrf.mxu0
        %v931 = vadd.f32 %v747, %v930
        %v932 = vpop.f32.mrf.mxu0
        %933 = vmatprep.mubr.f32.mxu0 0.0
        %v934 = vand.u32 %v212, 4294901760
        %v935 = vsub.f32 %v212, %v934
        %v936 = vand.u32 %v935, 4294901760
        %937 = vmatmul.mubr.f32.gmra.mxu0 %v936
        %v938 = vpop.f32.mrf.mxu0
        %v939 = vadd.f32 %v754, %v938
        %v940 = vpop.f32.mrf.mxu0
        %941 = vmatprep.mubr.f32.mxu0 0.0
        %v942 = vand.u32 %v215, 4294901760
        %v943 = vsub.f32 %v215, %v942
        %v944 = vand.u32 %v943, 4294901760
        %945 = vmatmul.mubr.f32.gmra.mxu0 %v944
        %v946 = vpop.f32.mrf.mxu0
        %v947 = vadd.f32 %v761, %v946
        %v948 = vpop.f32.mrf.mxu0
        %949 = vmatprep.mubr.f32.mxu0 0.0
        %v950 = vand.u32 %v218, 4294901760
        %v951 = vsub.f32 %v218, %v950
        %v952 = vand.u32 %v951, 4294901760
        %953 = vmatmul.mubr.f32.gmra.mxu0 %v952
        %v954 = vpop.f32.mrf.mxu0
        %v955 = vadd.f32 %v768, %v954
        %v956 = vpop.f32.mrf.mxu0
        %957 = vmatprep.mubr.f32.mxu0 0.0
        %v958 = vand.u32 %v221, 4294901760
        %v959 = vsub.f32 %v221, %v958
        %v960 = vand.u32 %v959, 4294901760
        %961 = vmatmul.mubr.f32.gmra.mxu0 %v960
        %v962 = vpop.f32.mrf.mxu0
        %v963 = vadd.f32 %v775, %v962
        %v964 = vpop.f32.mrf.mxu0
        %965 = vmatprep.mubr.f32.mxu0 0.0
        %v966 = vand.u32 %v224, 4294901760
        %v967 = vsub.f32 %v224, %v966
        %v968 = vand.u32 %v967, 4294901760
        %969 = vmatmul.mubr.f32.gmra.mxu0 %v968
        %v970 = vpop.f32.mrf.mxu0
        %v971 = vadd.f32 %v782, %v970
        %v972 = vpop.f32.mrf.mxu0
        %973 = vmatprep.mubr.f32.mxu0 0.0
        %v974 = vand.u32 %v227, 4294901760
        %v975 = vsub.f32 %v227, %v974
        %v976 = vand.u32 %v975, 4294901760
        %977 = vmatmul.mubr.f32.gmra.mxu0 %v976
        %v978 = vpop.f32.mrf.mxu0
        %v979 = vadd.f32 %v789, %v978
        %v980 = vpop.f32.mrf.mxu0
        %981 = vmatprep.mubr.f32.mxu0 0.0
        %v982 = vand.u32 %v230, 4294901760
        %v983 = vsub.f32 %v230, %v982
        %v984 = vand.u32 %v983, 4294901760
        %985 = vmatmul.mubr.f32.gmra.mxu0 %v984
        %v986 = vpop.f32.mrf.mxu0
        %v987 = vadd.f32 %v796, %v986
        %v988 = vpop.f32.mrf.mxu0
        %989 = vmatprep.mubr.f32.mxu0 0.0
        %v990 = vand.u32 %v233, 4294901760
        %v991 = vsub.f32 %v233, %v990
        %v992 = vand.u32 %v991, 4294901760
        %993 = vmatmul.mubr.f32.gmra.mxu0 %v992
        %v994 = vpop.f32.mrf.mxu0
        %v995 = vadd.f32 %v803, %v994
        %v996 = vpop.f32.mrf.mxu0
        %997 = vmatprep.mubr.f32.mxu0 0.0
        %v998 = vand.u32 %v236, 4294901760
        %v999 = vsub.f32 %v236, %v998
        %v1000 = vand.u32 %v999, 4294901760
        %1001 = vmatmul.mubr.f32.gmra.mxu0 %v1000
        %v1002 = vpop.f32.mrf.mxu0
        %v1003 = vadd.f32 %v810, %v1002
        %v1004 = vpop.f32.mrf.mxu0
        %1005 = vmatprep.mubr.f32.mxu0 0.0
        %v1006 = vand.u32 %v239, 4294901760
        %v1007 = vsub.f32 %v239, %v1006
        %v1008 = vand.u32 %v1007, 4294901760
        %1009 = vmatmul.mubr.f32.gmra.mxu0 %v1008
        %v1010 = vpop.f32.mrf.mxu0
        %v1011 = vadd.f32 %v817, %v1010
        %v1012 = vpop.f32.mrf.mxu0
        %1013 = vmatprep.mubr.f32.mxu0 0.0
        %v1014 = vand.u32 %v242, 4294901760
        %v1015 = vsub.f32 %v242, %v1014
        %v1016 = vand.u32 %v1015, 4294901760
        %1017 = vmatmul.mubr.f32.gmra.mxu0 %v1016
        %v1018 = vpop.f32.mrf.mxu0
        %v1019 = vadd.f32 %v824, %v1018
        %v1020 = vpop.f32.mrf.mxu0
        %1021 = vdwg.mxu0
        %1022 = vmatprep.subr.mxu0 0.0
        %1023 = vmatpush1.msra.mxu0 0.0
        %1024 = vmatprep.subr.mxu0 0.0
        %1025 = vmatpush1.msra.mxu0 0.0
        %1026 = vmatprep.subr.mxu0 0.0
        %1027 = vmatpush1.msra.mxu0 0.0
        %1028 = vmatprep.subr.mxu0 0.0
        %1029 = vmatpush1.msra.mxu0 0.0
        %1030 = vmatprep.subr.mxu0 0.0
        %1031 = vmatpush1.msra.mxu0 0.0
        %1032 = vmatprep.subr.mxu0 0.0
        %1033 = vmatpush1.msra.mxu0 0.0
        %1034 = vmatprep.subr.mxu0 0.0
        %1035 = vmatpush1.msra.mxu0 0.0
        %1036 = vmatprep.subr.mxu0 0.0
        %1037 = vmatpush1.msra.mxu0 0.0
        %1038 = vmatprep.subr.mxu0 0.0
        %1039 = vmatpush1.msra.mxu0 0.0
        %1040 = vmatprep.subr.mxu0 0.0
        %1041 = vmatpush1.msra.mxu0 0.0
        %1042 = vmatprep.subr.mxu0 0.0
        %1043 = vmatpush1.msra.mxu0 0.0
        %1044 = vmatprep.subr.mxu0 0.0
        %1045 = vmatpush1.msra.mxu0 0.0
        %1046 = vmatprep.subr.mxu0 0.0
        %1047 = vmatpush1.msra.mxu0 0.0
        %1048 = vmatprep.subr.mxu0 0.0
        %1049 = vmatpush1.msra.mxu0 0.0
        %1050 = vmatprep.subr.mxu0 0.0
        %v1051 = vand.u32 %v246, 4294901760
        %v1052 = vsub.f32 %v246, %v1051
        %v1053 = vand.u32 %v1052, 4294901760
        %1054 = vmatpush1.msra.mxu0 %v1053
        %1055 = vmatprep.subr.mxu0 0.0
        %v1056 = vand.u32 %v193, 4294901760
        %v1057 = vsub.f32 %v193, %v1056
        %v1058 = vand.u32 %v1057, 4294901760
        %1059 = vmatpush1.msra.mxu0 %v1058
        %1060 = vmatprep.subr.mxu0 0.0
        %1061 = vmatpush2.msra.mxu0 0.0
        %1062 = vmatprep.subr.mxu0 0.0
        %1063 = vmatpush2.msra.mxu0 0.0
        %1064 = vmatprep.subr.mxu0 0.0
        %1065 = vmatpush2.msra.mxu0 0.0
        %1066 = vmatprep.subr.mxu0 0.0
        %1067 = vmatpush2.msra.mxu0 0.0
        %1068 = vmatprep.subr.mxu0 0.0
        %1069 = vmatpush2.msra.mxu0 0.0
        %1070 = vmatprep.subr.mxu0 0.0
        %1071 = vmatpush2.msra.mxu0 0.0
        %1072 = vmatprep.subr.mxu0 0.0
        %1073 = vmatpush2.msra.mxu0 0.0
        %1074 = vmatprep.subr.mxu0 0.0
        %1075 = vmatpush2.msra.mxu0 0.0
        %1076 = vmatprep.subr.mxu0 0.0
        %1077 = vmatpush2.msra.mxu0 0.0
        %1078 = vmatprep.subr.mxu0 0.0
        %1079 = vmatpush2.msra.mxu0 0.0
        %1080 = vmatprep.subr.mxu0 0.0
        %1081 = vmatpush2.msra.mxu0 0.0
        %1082 = vmatprep.subr.mxu0 0.0
        %1083 = vmatpush2.msra.mxu0 0.0
        %1084 = vmatprep.subr.mxu0 0.0
        %1085 = vmatpush2.msra.mxu0 0.0
        %1086 = vmatprep.subr.mxu0 0.0
        %1087 = vmatpush2.msra.mxu0 0.0
        %1088 = vmatprep.subr.mxu0 0.0
        %1089 = vmatpush2.msra.mxu0 0.0
        %1090 = vmatprep.subr.mxu0 0.0
        %1091 = vmatpush2.msra.mxu0 0.0
        %1092 = vmatprep.mubr.f32.mxu0 0.0
        %v1093 = vand.u32 %v197, 4294901760
        %1094 = vmatmul.mubr.f32.gmra.mxu0 %v1093
        %v1095 = vpop.f32.mrf.mxu0
        %v1096 = vadd.f32 %v899, %v1095
        %v1097 = vpop.f32.mrf.mxu0
        %1098 = vmatprep.mubr.f32.mxu0 0.0
        %v1099 = vand.u32 %v200, 4294901760
        %1100 = vmatmul.mubr.f32.gmra.mxu0 %v1099
        %v1101 = vpop.f32.mrf.mxu0
        %v1102 = vadd.f32 %v907, %v1101
        %v1103 = vpop.f32.mrf.mxu0
        %1104 = vmatprep.mubr.f32.mxu0 0.0
        %v1105 = vand.u32 %v203, 4294901760
        %1106 = vmatmul.mubr.f32.gmra.mxu0 %v1105
        %v1107 = vpop.f32.mrf.mxu0
        %v1108 = vadd.f32 %v915, %v1107
        %v1109 = vpop.f32.mrf.mxu0
        %1110 = vmatprep.mubr.f32.mxu0 0.0
        %v1111 = vand.u32 %v206, 4294901760
        %1112 = vmatmul.mubr.f32.gmra.mxu0 %v1111
        %v1113 = vpop.f32.mrf.mxu0
        %v1114 = vadd.f32 %v923, %v1113
        %v1115 = vpop.f32.mrf.mxu0
        %1116 = vmatprep.mubr.f32.mxu0 0.0
        %v1117 = vand.u32 %v209, 4294901760
        %1118 = vmatmul.mubr.f32.gmra.mxu0 %v1117
        %v1119 = vpop.f32.mrf.mxu0
        %v1120 = vadd.f32 %v931, %v1119
        %v1121 = vpop.f32.mrf.mxu0
        %1122 = vmatprep.mubr.f32.mxu0 0.0
        %v1123 = vand.u32 %v212, 4294901760
        %1124 = vmatmul.mubr.f32.gmra.mxu0 %v1123
        %v1125 = vpop.f32.mrf.mxu0
        %v1126 = vadd.f32 %v939, %v1125
        %v1127 = vpop.f32.mrf.mxu0
        %1128 = vmatprep.mubr.f32.mxu0 0.0
        %v1129 = vand.u32 %v215, 4294901760
        %1130 = vmatmul.mubr.f32.gmra.mxu0 %v1129
        %v1131 = vpop.f32.mrf.mxu0
        %v1132 = vadd.f32 %v947, %v1131
        %v1133 = vpop.f32.mrf.mxu0
        %1134 = vmatprep.mubr.f32.mxu0 0.0
        %v1135 = vand.u32 %v218, 4294901760
        %1136 = vmatmul.mubr.f32.gmra.mxu0 %v1135
        %v1137 = vpop.f32.mrf.mxu0
        %v1138 = vadd.f32 %v955, %v1137
        %v1139 = vpop.f32.mrf.mxu0
        %1140 = vmatprep.mubr.f32.mxu0 0.0
        %v1141 = vand.u32 %v221, 4294901760
        %1142 = vmatmul.mubr.f32.gmra.mxu0 %v1141
        %v1143 = vpop.f32.mrf.mxu0
        %v1144 = vadd.f32 %v963, %v1143
        %v1145 = vpop.f32.mrf.mxu0
        %1146 = vmatprep.mubr.f32.mxu0 0.0
        %v1147 = vand.u32 %v224, 4294901760
        %1148 = vmatmul.mubr.f32.gmra.mxu0 %v1147
        %v1149 = vpop.f32.mrf.mxu0
        %v1150 = vadd.f32 %v971, %v1149
        %v1151 = vpop.f32.mrf.mxu0
        %1152 = vmatprep.mubr.f32.mxu0 0.0
        %v1153 = vand.u32 %v227, 4294901760
        %1154 = vmatmul.mubr.f32.gmra.mxu0 %v1153
        %v1155 = vpop.f32.mrf.mxu0
        %v1156 = vadd.f32 %v979, %v1155
        %v1157 = vpop.f32.mrf.mxu0
        %1158 = vmatprep.mubr.f32.mxu0 0.0
        %v1159 = vand.u32 %v230, 4294901760
        %1160 = vmatmul.mubr.f32.gmra.mxu0 %v1159
        %v1161 = vpop.f32.mrf.mxu0
        %v1162 = vadd.f32 %v987, %v1161
        %v1163 = vpop.f32.mrf.mxu0
        %1164 = vmatprep.mubr.f32.mxu0 0.0
        %v1165 = vand.u32 %v233, 4294901760
        %1166 = vmatmul.mubr.f32.gmra.mxu0 %v1165
        %v1167 = vpop.f32.mrf.mxu0
        %v1168 = vadd.f32 %v995, %v1167
        %v1169 = vpop.f32.mrf.mxu0
        %1170 = vmatprep.mubr.f32.mxu0 0.0
        %v1171 = vand.u32 %v236, 4294901760
        %1172 = vmatmul.mubr.f32.gmra.mxu0 %v1171
        %v1173 = vpop.f32.mrf.mxu0
        %v1174 = vadd.f32 %v1003, %v1173
        %v1175 = vpop.f32.mrf.mxu0
        %1176 = vmatprep.mubr.f32.mxu0 0.0
        %v1177 = vand.u32 %v239, 4294901760
        %1178 = vmatmul.mubr.f32.gmra.mxu0 %v1177
        %v1179 = vpop.f32.mrf.mxu0
        %v1180 = vadd.f32 %v1011, %v1179
        %v1181 = vpop.f32.mrf.mxu0
        %1182 = vmatprep.mubr.f32.mxu0 0.0
        %v1183 = vand.u32 %v242, 4294901760
        %1184 = vmatmul.mubr.f32.gmra.mxu0 %v1183
        %v1185 = vpop.f32.mrf.mxu0
        %v1186 = vadd.f32 %v1019, %v1185
        %v1187 = vpop.f32.mrf.mxu0
        %1188 = vdwg.mxu0
        %1189 = vmatprep.subr.mxu0 0.0
        %1190 = vmatpush1.msra.mxu0 0.0
        %1191 = vmatprep.subr.mxu0 0.0
        %1192 = vmatpush1.msra.mxu0 0.0
        %1193 = vmatprep.subr.mxu0 0.0
        %1194 = vmatpush1.msra.mxu0 0.0
        %1195 = vmatprep.subr.mxu0 0.0
        %1196 = vmatpush1.msra.mxu0 0.0
        %1197 = vmatprep.subr.mxu0 0.0
        %1198 = vmatpush1.msra.mxu0 0.0
        %1199 = vmatprep.subr.mxu0 0.0
        %1200 = vmatpush1.msra.mxu0 0.0
        %1201 = vmatprep.subr.mxu0 0.0
        %1202 = vmatpush1.msra.mxu0 0.0
        %1203 = vmatprep.subr.mxu0 0.0
        %1204 = vmatpush1.msra.mxu0 0.0
        %1205 = vmatprep.subr.mxu0 0.0
        %1206 = vmatpush1.msra.mxu0 0.0
        %1207 = vmatprep.subr.mxu0 0.0
        %1208 = vmatpush1.msra.mxu0 0.0
        %1209 = vmatprep.subr.mxu0 0.0
        %1210 = vmatpush1.msra.mxu0 0.0
        %1211 = vmatprep.subr.mxu0 0.0
        %1212 = vmatpush1.msra.mxu0 0.0
        %1213 = vmatprep.subr.mxu0 0.0
        %1214 = vmatpush1.msra.mxu0 0.0
        %1215 = vmatprep.subr.mxu0 0.0
        %1216 = vmatpush1.msra.mxu0 0.0
        %1217 = vmatprep.subr.mxu0 0.0
        %v1218 = vand.u32 %v246, 4294901760
        %1219 = vmatpush1.msra.mxu0 %v1218
        %1220 = vmatprep.subr.mxu0 0.0
        %v1221 = vand.u32 %v193, 4294901760
        %1222 = vmatpush1.msra.mxu0 %v1221
        %1223 = vmatprep.subr.mxu0 0.0
        %1224 = vmatpush2.msra.mxu0 0.0
        %1225 = vmatprep.subr.mxu0 0.0
        %1226 = vmatpush2.msra.mxu0 0.0
        %1227 = vmatprep.subr.mxu0 0.0
        %1228 = vmatpush2.msra.mxu0 0.0
        %1229 = vmatprep.subr.mxu0 0.0
        %1230 = vmatpush2.msra.mxu0 0.0
        %1231 = vmatprep.subr.mxu0 0.0
        %1232 = vmatpush2.msra.mxu0 0.0
        %1233 = vmatprep.subr.mxu0 0.0
        %1234 = vmatpush2.msra.mxu0 0.0
        %1235 = vmatprep.subr.mxu0 0.0
        %1236 = vmatpush2.msra.mxu0 0.0
        %1237 = vmatprep.subr.mxu0 0.0
        %1238 = vmatpush2.msra.mxu0 0.0
        %1239 = vmatprep.subr.mxu0 0.0
        %1240 = vmatpush2.msra.mxu0 0.0
        %1241 = vmatprep.subr.mxu0 0.0
        %1242 = vmatpush2.msra.mxu0 0.0
        %1243 = vmatprep.subr.mxu0 0.0
        %1244 = vmatpush2.msra.mxu0 0.0
        %1245 = vmatprep.subr.mxu0 0.0
        %1246 = vmatpush2.msra.mxu0 0.0
        %1247 = vmatprep.subr.mxu0 0.0
        %1248 = vmatpush2.msra.mxu0 0.0
        %1249 = vmatprep.subr.mxu0 0.0
        %1250 = vmatpush2.msra.mxu0 0.0
        %1251 = vmatprep.subr.mxu0 0.0
        %1252 = vmatpush2.msra.mxu0 0.0
        %1253 = vmatprep.subr.mxu0 0.0
        %1254 = vmatpush2.msra.mxu0 0.0
        %1255 = vmatprep.mubr.f32.mxu0 0.0
        %v1256 = vand.u32 %v197, 4294901760
        %1257 = vmatmul.mubr.f32.gmra.mxu0 %v1256
        %v1258 = vpop.f32.mrf.mxu0
        %v1259 = vadd.f32 %v1096, %v1258
        %v1260 = vpop.f32.mrf.mxu0
        %1261 = vmatprep.mubr.f32.mxu0 0.0
        %v1262 = vand.u32 %v200, 4294901760
        %1263 = vmatmul.mubr.f32.gmra.mxu0 %v1262
        %v1264 = vpop.f32.mrf.mxu0
        %v1265 = vadd.f32 %v1102, %v1264
        %v1266 = vpop.f32.mrf.mxu0
        %1267 = vmatprep.mubr.f32.mxu0 0.0
        %v1268 = vand.u32 %v203, 4294901760
        %1269 = vmatmul.mubr.f32.gmra.mxu0 %v1268
        %v1270 = vpop.f32.mrf.mxu0
        %v1271 = vadd.f32 %v1108, %v1270
        %v1272 = vpop.f32.mrf.mxu0
        %1273 = vmatprep.mubr.f32.mxu0 0.0
        %v1274 = vand.u32 %v206, 4294901760
        %1275 = vmatmul.mubr.f32.gmra.mxu0 %v1274
        %v1276 = vpop.f32.mrf.mxu0
        %v1277 = vadd.f32 %v1114, %v1276
        %v1278 = vpop.f32.mrf.mxu0
        %1279 = vmatprep.mubr.f32.mxu0 0.0
        %v1280 = vand.u32 %v209, 4294901760
        %1281 = vmatmul.mubr.f32.gmra.mxu0 %v1280
        %v1282 = vpop.f32.mrf.mxu0
        %v1283 = vadd.f32 %v1120, %v1282
        %v1284 = vpop.f32.mrf.mxu0
        %1285 = vmatprep.mubr.f32.mxu0 0.0
        %v1286 = vand.u32 %v212, 4294901760
        %1287 = vmatmul.mubr.f32.gmra.mxu0 %v1286
        %v1288 = vpop.f32.mrf.mxu0
        %v1289 = vadd.f32 %v1126, %v1288
        %v1290 = vpop.f32.mrf.mxu0
        %1291 = vmatprep.mubr.f32.mxu0 0.0
        %v1292 = vand.u32 %v215, 4294901760
        %1293 = vmatmul.mubr.f32.gmra.mxu0 %v1292
        %v1294 = vpop.f32.mrf.mxu0
        %v1295 = vadd.f32 %v1132, %v1294
        %v1296 = vpop.f32.mrf.mxu0
        %1297 = vmatprep.mubr.f32.mxu0 0.0
        %v1298 = vand.u32 %v218, 4294901760
        %1299 = vmatmul.mubr.f32.gmra.mxu0 %v1298
        %v1300 = vpop.f32.mrf.mxu0
        %v1301 = vadd.f32 %v1138, %v1300
        %v1302 = vpop.f32.mrf.mxu0
        %1303 = vmatprep.mubr.f32.mxu0 0.0
        %v1304 = vand.u32 %v221, 4294901760
        %1305 = vmatmul.mubr.f32.gmra.mxu0 %v1304
        %v1306 = vpop.f32.mrf.mxu0
        %v1307 = vadd.f32 %v1144, %v1306
        %v1308 = vpop.f32.mrf.mxu0
        %1309 = vmatprep.mubr.f32.mxu0 0.0
        %v1310 = vand.u32 %v224, 4294901760
        %1311 = vmatmul.mubr.f32.gmra.mxu0 %v1310
        %v1312 = vpop.f32.mrf.mxu0
        %v1313 = vadd.f32 %v1150, %v1312
        %v1314 = vpop.f32.mrf.mxu0
        %1315 = vmatprep.mubr.f32.mxu0 0.0
        %v1316 = vand.u32 %v227, 4294901760
        %1317 = vmatmul.mubr.f32.gmra.mxu0 %v1316
        %v1318 = vpop.f32.mrf.mxu0
        %v1319 = vadd.f32 %v1156, %v1318
        %v1320 = vpop.f32.mrf.mxu0
        %1321 = vmatprep.mubr.f32.mxu0 0.0
        %v1322 = vand.u32 %v230, 4294901760
        %1323 = vmatmul.mubr.f32.gmra.mxu0 %v1322
        %v1324 = vpop.f32.mrf.mxu0
        %v1325 = vadd.f32 %v1162, %v1324
        %v1326 = vpop.f32.mrf.mxu0
        %1327 = vmatprep.mubr.f32.mxu0 0.0
        %v1328 = vand.u32 %v233, 4294901760
        %1329 = vmatmul.mubr.f32.gmra.mxu0 %v1328
        %v1330 = vpop.f32.mrf.mxu0
        %v1331 = vadd.f32 %v1168, %v1330
        %v1332 = vpop.f32.mrf.mxu0
        %1333 = vmatprep.mubr.f32.mxu0 0.0
        %v1334 = vand.u32 %v236, 4294901760
        %1335 = vmatmul.mubr.f32.gmra.mxu0 %v1334
        %v1336 = vpop.f32.mrf.mxu0
        %v1337 = vadd.f32 %v1174, %v1336
        %v1338 = vpop.f32.mrf.mxu0
        %1339 = vmatprep.mubr.f32.mxu0 0.0
        %v1340 = vand.u32 %v239, 4294901760
        %1341 = vmatmul.mubr.f32.gmra.mxu0 %v1340
        %v1342 = vpop.f32.mrf.mxu0
        %v1343 = vadd.f32 %v1180, %v1342
        %v1344 = vpop.f32.mrf.mxu0
        %1345 = vmatprep.mubr.f32.mxu0 0.0
        %v1346 = vand.u32 %v242, 4294901760
        %1347 = vmatmul.mubr.f32.gmra.mxu0 %v1346
        %v1348 = vpop.f32.mrf.mxu0
        %v1349 = vadd.f32 %v1186, %v1348
        %v1350 = vpop.f32.mrf.mxu0
        %1351 = vdwg.mxu0
        %1352 = vst [vmem:[%s165] sm:$0xff] %v1259
        %1353 = vst [vmem:[%s165 + $0x8] sm:$0xff] %v1265
        %1354 = vst [vmem:[%s165 + $0x10] sm:$0xff] %v1271
        %1355 = vst [vmem:[%s165 + $0x18] sm:$0xff] %v1277
        %1356 = vst [vmem:[%s165 + $0x20] sm:$0xff] %v1283
        %1357 = vst [vmem:[%s165 + $0x28] sm:$0xff] %v1289
        %1358 = vst [vmem:[%s165 + $0x30] sm:$0xff] %v1295
        %1359 = vst [vmem:[%s165 + $0x38] sm:$0xff] %v1301
        %1360 = vst [vmem:[%s165 + $0x40] sm:$0xff] %v1307
        %1361 = vst [vmem:[%s165 + $0x48] sm:$0xff] %v1313
        %1362 = vst [vmem:[%s165 + $0x50] sm:$0xff] %v1319
        %1363 = vst [vmem:[%s165 + $0x58] sm:$0xff] %v1325
        %1364 = vst [vmem:[%s165 + $0x60] sm:$0xff] %v1331
        %1365 = vst [vmem:[%s165 + $0x68] sm:$0xff] %v1337
        %1366 = vst [vmem:[%s165 + $0x70] sm:$0xff] %v1343
        %1367 = vst [vmem:[%s165 + $0x78] sm:$0xff] %v1349
        %1368 = vst [vmem:[%s165 + $0x80] sm:$0xff] %v1259
        %1369 = vst [vmem:[%s165 + $0x88] sm:$0xff] %v1265
        %1370 = vst [vmem:[%s165 + $0x90] sm:$0xff] %v1271
        %1371 = vst [vmem:[%s165 + $0x98] sm:$0xff] %v1277
        %1372 = vst [vmem:[%s165 + $0xa0] sm:$0xff] %v1283
        %1373 = vst [vmem:[%s165 + $0xa8] sm:$0xff] %v1289
        %1374 = vst [vmem:[%s165 + $0xb0] sm:$0xff] %v1295
        %1375 = vst [vmem:[%s165 + $0xb8] sm:$0xff] %v1301
        %1376 = vst [vmem:[%s165 + $0xc0] sm:$0xff] %v1307
        %1377 = vst [vmem:[%s165 + $0xc8] sm:$0xff] %v1313
        %1378 = vst [vmem:[%s165 + $0xd0] sm:$0xff] %v1319
        %1379 = vst [vmem:[%s165 + $0xd8] sm:$0xff] %v1325
        %1380 = vst [vmem:[%s165 + $0xe0] sm:$0xff] %v1331
        %1381 = vst [vmem:[%s165 + $0xe8] sm:$0xff] %v1337
        %1382 = vst [vmem:[%s165 + $0xf0] sm:$0xff] %v1343
        %1383 = vst [vmem:[%s165 + $0xf8] sm:$0xff] %v1349
        %1384 = vst [vmem:[%s165 + $0x100] sm:$0xff] %v1259
        %1385 = vst [vmem:[%s165 + $0x108] sm:$0xff] %v1265
        %1386 = vst [vmem:[%s165 + $0x110] sm:$0xff] %v1271
        %1387 = vst [vmem:[%s165 + $0x118] sm:$0xff] %v1277
        %1388 = vst [vmem:[%s165 + $0x120] sm:$0xff] %v1283
        %1389 = vst [vmem:[%s165 + $0x128] sm:$0xff] %v1289
        %1390 = vst [vmem:[%s165 + $0x130] sm:$0xff] %v1295
        %1391 = vst [vmem:[%s165 + $0x138] sm:$0xff] %v1301
        %1392 = vst [vmem:[%s165 + $0x140] sm:$0xff] %v1307
        %1393 = vst [vmem:[%s165 + $0x148] sm:$0xff] %v1313
        %1394 = vst [vmem:[%s165 + $0x150] sm:$0xff] %v1319
        %1395 = vst [vmem:[%s165 + $0x158] sm:$0xff] %v1325
        %1396 = vst [vmem:[%s165 + $0x160] sm:$0xff] %v1331
        %1397 = vst [vmem:[%s165 + $0x168] sm:$0xff] %v1337
        %1398 = vst [vmem:[%s165 + $0x170] sm:$0xff] %v1343
        %1399 = vst [vmem:[%s165 + $0x178] sm:$0xff] %v1349
        %1400 = vst [vmem:[%s165 + $0x180] sm:$0xff] %v1259
        %1401 = vst [vmem:[%s165 + $0x188] sm:$0xff] %v1265
        %1402 = vst [vmem:[%s165 + $0x190] sm:$0xff] %v1271
        %1403 = vst [vmem:[%s165 + $0x198] sm:$0xff] %v1277
        %1404 = vst [vmem:[%s165 + $0x1a0] sm:$0xff] %v1283
        %1405 = vst [vmem:[%s165 + $0x1a8] sm:$0xff] %v1289
        %1406 = vst [vmem:[%s165 + $0x1b0] sm:$0xff] %v1295
        %1407 = vst [vmem:[%s165 + $0x1b8] sm:$0xff] %v1301
        %1408 = vst [vmem:[%s165 + $0x1c0] sm:$0xff] %v1307
        %1409 = vst [vmem:[%s165 + $0x1c8] sm:$0xff] %v1313
        %1410 = vst [vmem:[%s165 + $0x1d0] sm:$0xff] %v1319
        %1411 = vst [vmem:[%s165 + $0x1d8] sm:$0xff] %v1325
        %1412 = vst [vmem:[%s165 + $0x1e0] sm:$0xff] %v1331
        %1413 = vst [vmem:[%s165 + $0x1e8] sm:$0xff] %v1337
        %1414 = vst [vmem:[%s165 + $0x1f0] sm:$0xff] %v1343
        %1415 = vst [vmem:[%s165 + $0x1f8] sm:$0xff] %v1349
        %1416 = vst [vmem:[%s165 + $0x200] sm:$0xff] %v1259
        %1417 = vst [vmem:[%s165 + $0x208] sm:$0xff] %v1265
        %1418 = vst [vmem:[%s165 + $0x210] sm:$0xff] %v1271
        %1419 = vst [vmem:[%s165 + $0x218] sm:$0xff] %v1277
        %1420 = vst [vmem:[%s165 + $0x220] sm:$0xff] %v1283
        %1421 = vst [vmem:[%s165 + $0x228] sm:$0xff] %v1289
        %1422 = vst [vmem:[%s165 + $0x230] sm:$0xff] %v1295
        %1423 = vst [vmem:[%s165 + $0x238] sm:$0xff] %v1301
        %1424 = vst [vmem:[%s165 + $0x240] sm:$0xff] %v1307
        %1425 = vst [vmem:[%s165 + $0x248] sm:$0xff] %v1313
        %1426 = vst [vmem:[%s165 + $0x250] sm:$0xff] %v1319
        %1427 = vst [vmem:[%s165 + $0x258] sm:$0xff] %v1325
        %1428 = vst [vmem:[%s165 + $0x260] sm:$0xff] %v1331
        %1429 = vst [vmem:[%s165 + $0x268] sm:$0xff] %v1337
        %1430 = vst [vmem:[%s165 + $0x270] sm:$0xff] %v1343
        %1431 = vst [vmem:[%s165 + $0x278] sm:$0xff] %v1349
        %1432 = vst [vmem:[%s165 + $0x280] sm:$0xff] %v1259
        %1433 = vst [vmem:[%s165 + $0x288] sm:$0xff] %v1265
        %1434 = vst [vmem:[%s165 + $0x290] sm:$0xff] %v1271
        %1435 = vst [vmem:[%s165 + $0x298] sm:$0xff] %v1277
        %1436 = vst [vmem:[%s165 + $0x2a0] sm:$0xff] %v1283
        %1437 = vst [vmem:[%s165 + $0x2a8] sm:$0xff] %v1289
        %1438 = vst [vmem:[%s165 + $0x2b0] sm:$0xff] %v1295
        %1439 = vst [vmem:[%s165 + $0x2b8] sm:$0xff] %v1301
        %1440 = vst [vmem:[%s165 + $0x2c0] sm:$0xff] %v1307
        %1441 = vst [vmem:[%s165 + $0x2c8] sm:$0xff] %v1313
        %1442 = vst [vmem:[%s165 + $0x2d0] sm:$0xff] %v1319
        %1443 = vst [vmem:[%s165 + $0x2d8] sm:$0xff] %v1325
        %1444 = vst [vmem:[%s165 + $0x2e0] sm:$0xff] %v1331
        %1445 = vst [vmem:[%s165 + $0x2e8] sm:$0xff] %v1337
        %1446 = vst [vmem:[%s165 + $0x2f0] sm:$0xff] %v1343
        %1447 = vst [vmem:[%s165 + $0x2f8] sm:$0xff] %v1349
        %1448 = vst [vmem:[%s165 + $0x300] sm:$0xff] %v1259
        %1449 = vst [vmem:[%s165 + $0x308] sm:$0xff] %v1265
        %1450 = vst [vmem:[%s165 + $0x310] sm:$0xff] %v1271
        %1451 = vst [vmem:[%s165 + $0x318] sm:$0xff] %v1277
        %1452 = vst [vmem:[%s165 + $0x320] sm:$0xff] %v1283
        %1453 = vst [vmem:[%s165 + $0x328] sm:$0xff] %v1289
        %1454 = vst [vmem:[%s165 + $0x330] sm:$0xff] %v1295
        %1455 = vst [vmem:[%s165 + $0x338] sm:$0xff] %v1301
        %1456 = vst [vmem:[%s165 + $0x340] sm:$0xff] %v1307
        %1457 = vst [vmem:[%s165 + $0x348] sm:$0xff] %v1313
        %1458 = vst [vmem:[%s165 + $0x350] sm:$0xff] %v1319
        %1459 = vst [vmem:[%s165 + $0x358] sm:$0xff] %v1325
        %1460 = vst [vmem:[%s165 + $0x360] sm:$0xff] %v1331
        %1461 = vst [vmem:[%s165 + $0x368] sm:$0xff] %v1337
        %1462 = vst [vmem:[%s165 + $0x370] sm:$0xff] %v1343
        %1463 = vst [vmem:[%s165 + $0x378] sm:$0xff] %v1349
        %1464 = vst [vmem:[%s165 + $0x380] sm:$0xff] %v1259
        %1465 = vst [vmem:[%s165 + $0x388] sm:$0xff] %v1265
        %1466 = vst [vmem:[%s165 + $0x390] sm:$0xff] %v1271
        %1467 = vst [vmem:[%s165 + $0x398] sm:$0xff] %v1277
        %1468 = vst [vmem:[%s165 + $0x3a0] sm:$0xff] %v1283
        %1469 = vst [vmem:[%s165 + $0x3a8] sm:$0xff] %v1289
        %1470 = vst [vmem:[%s165 + $0x3b0] sm:$0xff] %v1295
        %1471 = vst [vmem:[%s165 + $0x3b8] sm:$0xff] %v1301
        %1472 = vst [vmem:[%s165 + $0x3c0] sm:$0xff] %v1307
        %1473 = vst [vmem:[%s165 + $0x3c8] sm:$0xff] %v1313
        %1474 = vst [vmem:[%s165 + $0x3d0] sm:$0xff] %v1319
        %1475 = vst [vmem:[%s165 + $0x3d8] sm:$0xff] %v1325
        %1476 = vst [vmem:[%s165 + $0x3e0] sm:$0xff] %v1331
        %1477 = vst [vmem:[%s165 + $0x3e8] sm:$0xff] %v1337
        %1478 = vst [vmem:[%s165 + $0x3f0] sm:$0xff] %v1343
        %1479 = vst [vmem:[%s165 + $0x3f8] sm:$0xff] %v1349
        %s1480 = sand.u32 %s90, 1
        %s1481 = scalar_lea.sflag [#allocation3], %s1480
        %s1482 = sand.u32 %s90, 1
        %s1483 = smul.addr %s1482, 1024
        %s1484 = scalar_lea.vmem [#allocation2], %s1483
        // Predicated region
        $region29: #{tpu_custom_call.1} parent=27 // pred_check
          %p1485 = pneg %p100
        $region30: #{tpu_custom_call.1} parent=27 // pred_check_branch
          %1487 = sbr.rel (%p1485) target = $region32
        $region31: #{tpu_custom_call.1} parent=27 // pred_region
          %s1488 = smul.u32 8, %s21
          %s1490 = ssub.s32 16384, 16384
          %1491 = vsyncadd %s1481, %s1490
          %s1492 = smul.addr %s1488, 16
          %s1493 = smul.addr %s20, 128
          %s1494 = sadd.s32 %s1492, %s1493
          %s1495 = smul.addr %s1494, 128
          %s1496 = scalar_lea.hbm %s2, %s1495
          %s1497 = sshll.u32 %s1484, 4
          %s1498 = int_to_ptr.vmem [resolvable:$true] %s1497
          %1503 = dma.vmem_to_hbm [thread:$0]  %s1498, 16384, %s1496, %s1481, 128, 128, 8
        $region32: #{tpu_custom_call.1} parent=27 // pred_fallthru
          _
      $region28: #{tpu_custom_call.1} parent=5 // pred_fallthru
        _
      %p1504 = scmp.le.s32.totalorder 2, %s11
      // Predicated region
      $region33: #{tpu_custom_call.1} parent=5 // pred_check
        %p1505 = pneg %p1504
      $region34: #{tpu_custom_call.1} parent=5 // pred_check_branch
        %1507 = sbr.rel (%p1505) target = $region36
      $region35: #{tpu_custom_call.1} parent=5 // pred_region
        %s1508 = ssub.s32 %s11, 2
        // Predicated region
        $region37: #{tpu_custom_call.1} parent=35 // pred_check
          %p1509 = pneg %p106
        $region38: #{tpu_custom_call.1} parent=35 // pred_check_branch
          %1511 = sbr.rel (%p1509) target = $region40
        $region39: #{tpu_custom_call.1} parent=35 // pred_region
          %s1512 = sand.u32 %s91, 1
          %s1513 = scalar_lea.sflag [#allocation3], %s1512
          %s1514 = sand.u32 %s91, 1
          %s1515 = smul.addr %s1514, 1024
          %s1516 = scalar_lea.vmem [#allocation2], %s1515
          %1517 = dma.done %s1513, 16384
        $region40: #{tpu_custom_call.1} parent=35 // pred_fallthru
          _
      $region36: #{tpu_custom_call.1} parent=5 // pred_fallthru
        _
    $region6: #{tpu_custom_call.1} parent=1 // loop_footer
      %s15 = sadd.s32 1, %s11
    $region7: #{tpu_custom_call.1} parent=1 // loop_footer_branch
      %10 = sbr.rel target = $region3
    $region8: #{tpu_custom_call.1} parent=1 // loop_exit
      _
    %1518 = vsyncpa [#allocation3], 1
    %s1519 = scalar_lea.sflag [#allocation3], 1
    %1520 = vsyncpa %s1519, 1

</llo_original>
